<compile_context>
chip_gen: v7x
topology: tpu7x:2x2x1
jax: 0.10.0
libtpu: 0.0.40
codegen_flags: <defaults>
</compile_context>

<pallas_src>
import functools

import jax
import jax.numpy as jnp
from jax.experimental import pallas as pl
from jax.experimental.pallas import tpu as pltpu


# ----------------------------- kernel helpers -----------------------------

def _layernorm(v, eps=1e-6):
    # PyTorch nn.LayerNorm(elementwise_affine=False), biased variance, fp32.
    mu = jnp.mean(v, axis=-1, keepdims=True)
    var = jnp.mean((v - mu) ** 2, axis=-1, keepdims=True)
    return (v - mu) * jax.lax.rsqrt(var + eps)


def _gelu_tanh(v):
    c0 = 0.7978845608028654  # sqrt(2/pi)
    return 0.5 * v * (1.0 + jnp.tanh(c0 * (v + 0.044715 * v * v * v)))


# ------------------------------- the kernel -------------------------------

def dit_block_kernel(x_ref, msa_ref, mlp_ref,
                     qkv_w_ref, qkv_b_ref, proj_w_ref, proj_b_ref,
                     w1_ref, b1_ref, w2_ref, b2_ref,
                     o_ref,
                     q_s, k_s, v_s, attn_s,
                     *, num_heads):
    x = x_ref[...].astype(jnp.float32)                 # (bt, N, D)
    bt, N, D = x.shape
    hd = D // num_heads

    msa = msa_ref[...]                                  # (bt, 1, 3D) f32
    mlp = mlp_ref[...]                                  # (bt, 1, 3D) f32
    shift_msa, scale_msa, gate_msa = msa[:, :, :D], msa[:, :, D:2 * D], msa[:, :, 2 * D:]
    shift_mlp, scale_mlp, gate_mlp = mlp[:, :, :D], mlp[:, :, D:2 * D], mlp[:, :, 2 * D:]

    # ----- attention branch:  x + gate_msa * Attn(modulate(LN(x))) -----
    h = _layernorm(x) * (1.0 + scale_msa) + shift_msa            # (bt, N, D)
    # Merge batch-tile rows into the matmul M dimension (layout-free for N%8==0).
    h2d = h.reshape(bt * N, D).astype(jnp.bfloat16)
    qkv = jnp.dot(h2d, qkv_w_ref[...],
                  preferred_element_type=jnp.float32) + qkv_b_ref[...]   # (bt*N, 3D)

    scale = float(hd) ** -0.5
    # Head-split into head-major VMEM slabs so attention runs as one batched
    # MXU op per stage (no per-head matmuls, no concatenate).
    for b in range(bt):
        rows = slice(b * N, (b + 1) * N)
        for hi in range(num_heads):
            g = b * num_heads + hi
            q_s[g] = (qkv[rows, hi * hd:(hi + 1) * hd] * scale).astype(jnp.bfloat16)
            k_s[g] = qkv[rows, D + hi * hd:D + (hi + 1) * hd].astype(jnp.bfloat16)
            v_s[g] = qkv[rows, 2 * D + hi * hd:2 * D + (hi + 1) * hd].astype(jnp.bfloat16)

    # Batched attention over all (batch, head) pairs (fp32 accumulation / softmax).
    s = jnp.einsum('hqd,hkd->hqk', q_s[...], k_s[...],
                   preferred_element_type=jnp.float32)           # (bt*nh, N, N)
    s = s - jnp.max(s, axis=-1, keepdims=True)
    p = jnp.exp(s)
    p = p * pl.reciprocal(jnp.sum(p, axis=-1, keepdims=True), approx=True)
    o = jnp.einsum('hqk,hkd->hqd', p.astype(jnp.bfloat16), v_s[...],
                   preferred_element_type=jnp.float32)           # (bt*nh, N, hd)

    # Merge heads back into a lane-contiguous (bt*N, D) slab for the projection.
    for b in range(bt):
        for hi in range(num_heads):
            attn_s[b * N:(b + 1) * N, hi * hd:(hi + 1) * hd] = (
                o[b * num_heads + hi].astype(jnp.bfloat16))

    attn = jnp.dot(attn_s[...], proj_w_ref[...],
                   preferred_element_type=jnp.float32) + proj_b_ref[...]  # (bt*N, D)
    x = x + gate_msa * attn.reshape(bt, N, D)

    # ----- MLP branch:  x + gate_mlp * MLP(modulate(LN(x))) -----
    h2 = _layernorm(x) * (1.0 + scale_mlp) + shift_mlp
    m = jnp.dot(h2.reshape(bt * N, D).astype(jnp.bfloat16), w1_ref[...],
                preferred_element_type=jnp.float32) + b1_ref[...]         # (bt*N, H)
    m = _gelu_tanh(m)
    m = jnp.dot(m.astype(jnp.bfloat16), w2_ref[...],
                preferred_element_type=jnp.float32) + b2_ref[...]         # (bt*N, D)
    x = x + gate_mlp * m.reshape(bt, N, D)

    o_ref[...] = x.astype(o_ref.dtype)


# -------------------------------- wrapper ----------------------------------

def _pick_batch_tile(B, N, target_rows=512):
    """Largest divisor of B such that bt*N stays at/below a few MXU passes."""
    bt = 1
    for cand in range(1, B + 1):
        if B % cand == 0 and cand * N <= target_rows:
            bt = cand
    return bt


def dit_block(x, c, t, params, *, num_heads, batch_tile=None):
    B, N, D = x.shape
    H = params["w1"].shape[1]
    assert D % num_heads == 0, "hidden size must be divisible by num_heads"
    hd = D // num_heads
    f32, bf16 = jnp.float32, jnp.bfloat16

    bt = batch_tile if batch_tile is not None else _pick_batch_tile(B, N)
    assert B % bt == 0

    # adaLN modulation hoisted out of the kernel: (B, D) x (D, 3D) matmuls that
    # would otherwise be M=1 matmuls per grid step and pin two (D, 3D) weights
    # in VMEM for the whole kernel.  Pass each branch packed as (B, 1, 3D).
    silu = lambda v: v * jax.nn.sigmoid(v)
    msa_mod = (silu(c.astype(f32)) @ params["ada_w"].astype(f32)
               + params["ada_b"].astype(f32)).reshape(B, 1, 3 * D)
    mlp_mod = (silu(t.astype(f32)) @ params["adat_w"].astype(f32)
               + params["adat_b"].astype(f32)).reshape(B, 1, 3 * D)

    # Matmul operands in bf16 (fp32 accumulation inside the kernel); biases f32.
    qkv_w = params["qkv_w"].astype(bf16)
    proj_w = params["proj_w"].astype(bf16)
    w1 = params["w1"].astype(bf16)
    w2 = params["w2"].astype(bf16)
    qkv_b = params["qkv_b"].astype(f32)
    proj_b = params["proj_b"].astype(f32)
    b1 = params["b1"].astype(f32)
    b2 = params["b2"].astype(f32)

    kernel = functools.partial(dit_block_kernel, num_heads=num_heads)
    full = lambda shape: pl.BlockSpec(shape, lambda b: (0,) * len(shape))
    tile3 = lambda shape: pl.BlockSpec(shape, lambda b: (b, 0, 0))

    # TODO(synk): at production sizes (D~1152, H~4608) also tile the (D,H)/
    # (H,D)/(D,3D) weights over an inner "arbitrary" grid axis (mandatory for
    # v7x's 64 MiB VMEM).
    return pl.pallas_call(
        kernel,
        out_shape=jax.ShapeDtypeStruct((B, N, D), x.dtype),
        grid=(B // bt,),
        in_specs=[
            tile3((bt, N, D)),                              # x (batch-tile block)
            tile3((bt, 1, 3 * D)),                          # shift/scale/gate msa
            tile3((bt, 1, 3 * D)),                          # shift/scale/gate mlp
            full((D, 3 * D)), full((1, 3 * D)),             # attn.qkv
            full((D, D)), full((1, D)),                     # attn.proj
            full((D, H)), full((1, H)),                     # mlp.fc1
            full((H, D)), full((1, D)),                     # mlp.fc2
        ],
        out_specs=tile3((bt, N, D)),
        scratch_shapes=[
            pltpu.VMEM((bt * num_heads, N, hd), bf16),      # q slab
            pltpu.VMEM((bt * num_heads, N, hd), bf16),      # k slab
            pltpu.VMEM((bt * num_heads, N, hd), bf16),      # v slab
            pltpu.VMEM((bt * N, D), bf16),                  # merged attention out
        ],
        compiler_params=pltpu.CompilerParams(
            dimension_semantics=("parallel",),
            vmem_limit_bytes=48 * 1024 * 1024),
    )(x, msa_mod, mlp_mod,
      qkv_w, qkv_b, proj_w, proj_b, w1, b1, w2, b2)


# --------------------------- pure-JAX reference ----------------------------

def ref_dit_block(x, c, t, p, *, num_heads):
    B, N, D = x.shape
    hd = D // num_heads
    silu = lambda v: v * jax.nn.sigmoid(v)

    def ln(v):
        mu = v.mean(-1, keepdims=True)
        var = ((v - mu) ** 2).mean(-1, keepdims=True)
        return (v - mu) / jnp.sqrt(var + 1e-6)

    ada = silu(c) @ p["ada_w"] + p["ada_b"]
    shift_msa, scale_msa, gate_msa = ada[:, :D], ada[:, D:2 * D], ada[:, 2 * D:]
    adat = silu(t) @ p["adat_w"] + p["adat_b"]
    shift_mlp, scale_mlp, gate_mlp = adat[:, :D], adat[:, D:2 * D], adat[:, 2 * D:]

    h = ln(x) * (1 + scale_msa[:, None, :]) + shift_msa[:, None, :]
    qkv = h @ p["qkv_w"] + p["qkv_b"]
    qkv = qkv.reshape(B, N, 3, num_heads, hd).transpose(2, 0, 3, 1, 4)
    q, k, v = qkv[0], qkv[1], qkv[2]                           # (B, nh, N, hd)
    s = jnp.einsum("bhnd,bhmd->bhnm", q, k) * (hd ** -0.5)
    attn = jax.nn.softmax(s, axis=-1)
    o = jnp.einsum("bhnm,bhmd->bhnd", attn, v)
    o = o.transpose(0, 2, 1, 3).reshape(B, N, D)
    o = o @ p["proj_w"] + p["proj_b"]
    x = x + gate_msa[:, None, :] * o

    h2 = ln(x) * (1 + scale_mlp[:, None, :]) + shift_mlp[:, None, :]
    m = h2 @ p["w1"] + p["b1"]
    m = 0.5 * m * (1.0 + jnp.tanh(0.7978845608028654 * (m + 0.044715 * m ** 3)))
    m = m @ p["w2"] + p["b2"]
    x = x + gate_mlp[:, None, :] * m
    return x


# ----------------------------------- main -----------------------------------

if __name__ == "__main__":
    B, N, D = 2, 8, 32
    NUM_HEADS = 4
    MLP_RATIO = 4.0
    H = int(D * MLP_RATIO)

    key = jax.random.PRNGKey(0)
    ks = jax.random.split(key, 20)

    def init(k, shape, scale=0.05):
        return (scale * jax.random.normal(k, shape)).astype(jnp.float32)

    x = init(ks[0], (B, N, D), scale=1.0)
    c = init(ks[1], (B, D), scale=1.0)
    t = init(ks[2], (B, D), scale=1.0)

    params = {
        "ada_w": init(ks[3], (D, 3 * D)),  "ada_b": init(ks[4], (1, 3 * D)),
        "adat_w": init(ks[5], (D, 3 * D)), "adat_b": init(ks[6], (1, 3 * D)),
        "qkv_w": init(ks[7], (D, 3 * D)),  "qkv_b": init(ks[8], (1, 3 * D)),
        "proj_w": init(ks[9], (D, D)),     "proj_b": init(ks[10], (1, D)),
        "w1": init(ks[11], (D, H)),        "b1": init(ks[12], (1, H)),
        "w2": init(ks[13], (H, D)),        "b2": init(ks[14], (1, D)),
    }

    out = dit_block(x, c, t, params, num_heads=NUM_HEADS)
    out = jax.block_until_ready(out)

    ref = ref_dit_block(x, c, t, params, num_heads=NUM_HEADS)
    ref = jax.block_until_ready(ref)

    assert out.shape == (B, N, D) and out.dtype == jnp.float32
    err = jnp.max(jnp.abs(out - ref))
    assert jnp.allclose(out, ref, atol=1e-2, rtol=1e-2), f"max abs err {err}"

    print("KERNEL_OK")
</pallas_src>

<mosaic_0001>
module attributes {stable_mosaic.version = 11 : i64} {
  func.func @dit_block_kernel(%arg0: i32, %arg1: memref<2x8x32xf32, #tpu.memory_space<vmem>>, %arg2: memref<2x1x96xf32, #tpu.memory_space<vmem>>, %arg3: memref<2x1x96xf32, #tpu.memory_space<vmem>>, %arg4: memref<32x96xbf16, #tpu.memory_space<vmem>>, %arg5: memref<1x96xf32, #tpu.memory_space<vmem>>, %arg6: memref<32x32xbf16, #tpu.memory_space<vmem>>, %arg7: memref<1x32xf32, #tpu.memory_space<vmem>>, %arg8: memref<32x128xbf16, #tpu.memory_space<vmem>>, %arg9: memref<1x128xf32, #tpu.memory_space<vmem>>, %arg10: memref<128x32xbf16, #tpu.memory_space<vmem>>, %arg11: memref<1x32xf32, #tpu.memory_space<vmem>>, %arg12: memref<2x8x32xf32, #tpu.memory_space<vmem>>, %arg13: memref<8x8x8xbf16, #tpu.memory_space<vmem>>, %arg14: memref<8x8x8xbf16, #tpu.memory_space<vmem>>, %arg15: memref<8x8x8xbf16, #tpu.memory_space<vmem>>, %arg16: memref<16x32xbf16, #tpu.memory_space<vmem>>) attributes {dimension_semantics = [#tpu.dimension_semantics<parallel>], iteration_bounds = array<i64: 1>, scalar_prefetch = 0 : i64, scratch_operands = 4 : i64, tpu.core_type = #tpu.core_type<tc>, window_params = [{transform_indices = @transform_0, window_bounds = array<i64: 2, 8, 32>}, {transform_indices = @transform_1, window_bounds = array<i64: 2, 1, 96>}, {transform_indices = @transform_2, window_bounds = array<i64: 2, 1, 96>}, {pipeline_mode = #tpu.pipeline_mode<synchronous>, transform_indices = @transform_3, window_bounds = array<i64: 32, 96>}, {pipeline_mode = #tpu.pipeline_mode<synchronous>, transform_indices = @transform_4, window_bounds = array<i64: 1, 96>}, {pipeline_mode = #tpu.pipeline_mode<synchronous>, transform_indices = @transform_5, window_bounds = array<i64: 32, 32>}, {pipeline_mode = #tpu.pipeline_mode<synchronous>, transform_indices = @transform_6, window_bounds = array<i64: 1, 32>}, {pipeline_mode = #tpu.pipeline_mode<synchronous>, transform_indices = @transform_7, window_bounds = array<i64: 32, 128>}, {pipeline_mode = #tpu.pipeline_mode<synchronous>, transform_indices = @transform_8, window_bounds = array<i64: 1, 128>}, {pipeline_mode = #tpu.pipeline_mode<synchronous>, transform_indices = @transform_9, window_bounds = array<i64: 128, 32>}, {pipeline_mode = #tpu.pipeline_mode<synchronous>, transform_indices = @transform_10, window_bounds = array<i64: 1, 32>}, {transform_indices = @transform_11, window_bounds = array<i64: 2, 8, 32>}]} {
    %c0 = arith.constant 0 : index
    %c0_0 = arith.constant 0 : index
    %c0_1 = arith.constant 0 : index
    %0 = vector.load %arg1[%c0, %c0_0, %c0_1] : memref<2x8x32xf32, #tpu.memory_space<vmem>>, vector<2x8x32xf32>
    %c0_2 = arith.constant 0 : index
    %c0_3 = arith.constant 0 : index
    %c0_4 = arith.constant 0 : index
    %1 = vector.load %arg2[%c0_2, %c0_3, %c0_4] : memref<2x1x96xf32, #tpu.memory_space<vmem>>, vector<2x1x96xf32>
    %c0_5 = arith.constant 0 : index
    %c0_6 = arith.constant 0 : index
    %c0_7 = arith.constant 0 : index
    %2 = vector.load %arg3[%c0_5, %c0_6, %c0_7] : memref<2x1x96xf32, #tpu.memory_space<vmem>>, vector<2x1x96xf32>
    %3 = vector.extract_strided_slice %1 {offsets = [0, 0, 0], sizes = [2, 1, 32], strides = [1, 1, 1]} : vector<2x1x96xf32> to vector<2x1x32xf32>
    %4 = vector.extract_strided_slice %1 {offsets = [0, 0, 32], sizes = [2, 1, 32], strides = [1, 1, 1]} : vector<2x1x96xf32> to vector<2x1x32xf32>
    %5 = vector.extract_strided_slice %1 {offsets = [0, 0, 64], sizes = [2, 1, 32], strides = [1, 1, 1]} : vector<2x1x96xf32> to vector<2x1x32xf32>
    %6 = vector.extract_strided_slice %2 {offsets = [0, 0, 0], sizes = [2, 1, 32], strides = [1, 1, 1]} : vector<2x1x96xf32> to vector<2x1x32xf32>
    %7 = vector.extract_strided_slice %2 {offsets = [0, 0, 32], sizes = [2, 1, 32], strides = [1, 1, 1]} : vector<2x1x96xf32> to vector<2x1x32xf32>
    %8 = vector.extract_strided_slice %2 {offsets = [0, 0, 64], sizes = [2, 1, 32], strides = [1, 1, 1]} : vector<2x1x96xf32> to vector<2x1x32xf32>
    %cst = arith.constant dense<0.000000e+00> : vector<2x8xf32>
    %9 = vector.multi_reduction <add>, %0, %cst [2] : vector<2x8x32xf32> to vector<2x8xf32>
    %10 = vector.shape_cast %9 : vector<2x8xf32> to vector<2x8x1xf32>
    %cst_8 = arith.constant 3.200000e+01 : f32
    %11 = vector.broadcast %cst_8 : f32 to vector<2x8x1xf32>
    %12 = arith.divf %10, %11 : vector<2x8x1xf32>
    %13 = vector.broadcast %12 : vector<2x8x1xf32> to vector<2x8x32xf32>
    %14 = arith.subf %0, %13 : vector<2x8x32xf32>
    %15 = arith.mulf %14, %14 : vector<2x8x32xf32>
    %cst_9 = arith.constant dense<0.000000e+00> : vector<2x8xf32>
    %16 = vector.multi_reduction <add>, %15, %cst_9 [2] : vector<2x8x32xf32> to vector<2x8xf32>
    %17 = vector.shape_cast %16 : vector<2x8xf32> to vector<2x8x1xf32>
    %cst_10 = arith.constant 3.200000e+01 : f32
    %18 = vector.broadcast %cst_10 : f32 to vector<2x8x1xf32>
    %19 = arith.divf %17, %18 : vector<2x8x1xf32>
    %20 = vector.broadcast %12 : vector<2x8x1xf32> to vector<2x8x32xf32>
    %21 = arith.subf %0, %20 : vector<2x8x32xf32>
    %cst_11 = arith.constant 9.99999997E-7 : f32
    %22 = vector.broadcast %cst_11 : f32 to vector<2x8x1xf32>
    %23 = arith.addf %19, %22 : vector<2x8x1xf32>
    %24 = math.rsqrt %23 : vector<2x8x1xf32>
    %25 = vector.broadcast %24 : vector<2x8x1xf32> to vector<2x8x32xf32>
    %26 = arith.mulf %21, %25 : vector<2x8x32xf32>
    %cst_12 = arith.constant 1.000000e+00 : f32
    %27 = vector.broadcast %cst_12 : f32 to vector<2x1x32xf32>
    %28 = arith.addf %27, %4 : vector<2x1x32xf32>
    %29 = vector.broadcast %28 : vector<2x1x32xf32> to vector<2x8x32xf32>
    %30 = arith.mulf %26, %29 : vector<2x8x32xf32>
    %31 = vector.broadcast %3 : vector<2x1x32xf32> to vector<2x8x32xf32>
    %32 = arith.addf %30, %31 : vector<2x8x32xf32>
    %33 = vector.shape_cast %32 : vector<2x8x32xf32> to vector<16x32xf32>
    %34 = arith.truncf %33 : vector<16x32xf32> to vector<16x32xbf16>
    %c0_13 = arith.constant 0 : index
    %c0_14 = arith.constant 0 : index
    %35 = vector.load %arg4[%c0_13, %c0_14] : memref<32x96xbf16, #tpu.memory_space<vmem>>, vector<32x96xbf16>
    %cst_15 = arith.constant dense<0.000000e+00> : vector<16x96xf32>
    %36 = tpu.matmul %34, %35, %cst_15 {dimension_numbers = #tpu.dot_dimension_numbers<[1], [0], [0], [1], [0, 0, 1, 1], [], []>} : vector<16x32xbf16>, vector<32x96xbf16>, vector<16x96xf32> -> vector<16x96xf32>
    %c0_16 = arith.constant 0 : index
    %c0_17 = arith.constant 0 : index
    %37 = vector.load %arg5[%c0_16, %c0_17] : memref<1x96xf32, #tpu.memory_space<vmem>>, vector<1x96xf32>
    %38 = vector.broadcast %37 : vector<1x96xf32> to vector<16x96xf32>
    %39 = arith.addf %36, %38 : vector<16x96xf32>
    %40 = vector.extract_strided_slice %39 {offsets = [0, 0], sizes = [8, 8], strides = [1, 1]} : vector<16x96xf32> to vector<8x8xf32>
    %cst_18 = arith.constant 0.353553385 : f32
    %41 = vector.broadcast %cst_18 : f32 to vector<8x8xf32>
    %42 = arith.mulf %40, %41 : vector<8x8xf32>
    %43 = arith.truncf %42 : vector<8x8xf32> to vector<8x8xbf16>
    %c0_19 = arith.constant 0 : index
    %c0_20 = arith.constant 0 : index
    %c0_21 = arith.constant 0 : index
    %44 = vector.load %arg13[%c0_19, %c0_20, %c0_21] : memref<8x8x8xbf16, #tpu.memory_space<vmem>>, vector<1x8x8xbf16>
    %45 = vector.shape_cast %44 : vector<1x8x8xbf16> to vector<8x8xbf16>
    %46 = vector.shape_cast %43 : vector<8x8xbf16> to vector<1x8x8xbf16>
    tpu.vector_store %arg13[%c0_19, %c0_20, %c0_21], %46 {strides = array<i32>} : memref<8x8x8xbf16, #tpu.memory_space<vmem>>, vector<1x8x8xbf16>,
    %47 = vector.extract_strided_slice %39 {offsets = [0, 32], sizes = [8, 8], strides = [1, 1]} : vector<16x96xf32> to vector<8x8xf32>
    %48 = arith.truncf %47 : vector<8x8xf32> to vector<8x8xbf16>
    %c0_22 = arith.constant 0 : index
    %c0_23 = arith.constant 0 : index
    %c0_24 = arith.constant 0 : index
    %49 = vector.load %arg14[%c0_22, %c0_23, %c0_24] : memref<8x8x8xbf16, #tpu.memory_space<vmem>>, vector<1x8x8xbf16>
    %50 = vector.shape_cast %49 : vector<1x8x8xbf16> to vector<8x8xbf16>
    %51 = vector.shape_cast %48 : vector<8x8xbf16> to vector<1x8x8xbf16>
    tpu.vector_store %arg14[%c0_22, %c0_23, %c0_24], %51 {strides = array<i32>} : memref<8x8x8xbf16, #tpu.memory_space<vmem>>, vector<1x8x8xbf16>,
    %52 = vector.extract_strided_slice %39 {offsets = [0, 64], sizes = [8, 8], strides = [1, 1]} : vector<16x96xf32> to vector<8x8xf32>
    %53 = arith.truncf %52 : vector<8x8xf32> to vector<8x8xbf16>
    %c0_25 = arith.constant 0 : index
    %c0_26 = arith.constant 0 : index
    %c0_27 = arith.constant 0 : index
    %54 = vector.load %arg15[%c0_25, %c0_26, %c0_27] : memref<8x8x8xbf16, #tpu.memory_space<vmem>>, vector<1x8x8xbf16>
    %55 = vector.shape_cast %54 : vector<1x8x8xbf16> to vector<8x8xbf16>
    %56 = vector.shape_cast %53 : vector<8x8xbf16> to vector<1x8x8xbf16>
    tpu.vector_store %arg15[%c0_25, %c0_26, %c0_27], %56 {strides = array<i32>} : memref<8x8x8xbf16, #tpu.memory_space<vmem>>, vector<1x8x8xbf16>,
    %57 = vector.extract_strided_slice %39 {offsets = [0, 8], sizes = [8, 8], strides = [1, 1]} : vector<16x96xf32> to vector<8x8xf32>
    %cst_28 = arith.constant 0.353553385 : f32
    %58 = vector.broadcast %cst_28 : f32 to vector<8x8xf32>
    %59 = arith.mulf %57, %58 : vector<8x8xf32>
    %60 = arith.truncf %59 : vector<8x8xf32> to vector<8x8xbf16>
    %c1 = arith.constant 1 : index
    %c0_29 = arith.constant 0 : index
    %c0_30 = arith.constant 0 : index
    %61 = vector.load %arg13[%c1, %c0_29, %c0_30] : memref<8x8x8xbf16, #tpu.memory_space<vmem>>, vector<1x8x8xbf16>
    %62 = vector.shape_cast %61 : vector<1x8x8xbf16> to vector<8x8xbf16>
    %63 = vector.shape_cast %60 : vector<8x8xbf16> to vector<1x8x8xbf16>
    tpu.vector_store %arg13[%c1, %c0_29, %c0_30], %63 {strides = array<i32>} : memref<8x8x8xbf16, #tpu.memory_space<vmem>>, vector<1x8x8xbf16>,
    %64 = vector.extract_strided_slice %39 {offsets = [0, 40], sizes = [8, 8], strides = [1, 1]} : vector<16x96xf32> to vector<8x8xf32>
    %65 = arith.truncf %64 : vector<8x8xf32> to vector<8x8xbf16>
    %c1_31 = arith.constant 1 : index
    %c0_32 = arith.constant 0 : index
    %c0_33 = arith.constant 0 : index
    %66 = vector.load %arg14[%c1_31, %c0_32, %c0_33] : memref<8x8x8xbf16, #tpu.memory_space<vmem>>, vector<1x8x8xbf16>
    %67 = vector.shape_cast %66 : vector<1x8x8xbf16> to vector<8x8xbf16>
    %68 = vector.shape_cast %65 : vector<8x8xbf16> to vector<1x8x8xbf16>
    tpu.vector_store %arg14[%c1_31, %c0_32, %c0_33], %68 {strides = array<i32>} : memref<8x8x8xbf16, #tpu.memory_space<vmem>>, vector<1x8x8xbf16>,
    %69 = vector.extract_strided_slice %39 {offsets = [0, 72], sizes = [8, 8], strides = [1, 1]} : vector<16x96xf32> to vector<8x8xf32>
    %70 = arith.truncf %69 : vector<8x8xf32> to vector<8x8xbf16>
    %c1_34 = arith.constant 1 : index
    %c0_35 = arith.constant 0 : index
    %c0_36 = arith.constant 0 : index
    %71 = vector.load %arg15[%c1_34, %c0_35, %c0_36] : memref<8x8x8xbf16, #tpu.memory_space<vmem>>, vector<1x8x8xbf16>
    %72 = vector.shape_cast %71 : vector<1x8x8xbf16> to vector<8x8xbf16>
    %73 = vector.shape_cast %70 : vector<8x8xbf16> to vector<1x8x8xbf16>
    tpu.vector_store %arg15[%c1_34, %c0_35, %c0_36], %73 {strides = array<i32>} : memref<8x8x8xbf16, #tpu.memory_space<vmem>>, vector<1x8x8xbf16>,
    %74 = vector.extract_strided_slice %39 {offsets = [0, 16], sizes = [8, 8], strides = [1, 1]} : vector<16x96xf32> to vector<8x8xf32>
    %cst_37 = arith.constant 0.353553385 : f32
    %75 = vector.broadcast %cst_37 : f32 to vector<8x8xf32>
    %76 = arith.mulf %74, %75 : vector<8x8xf32>
    %77 = arith.truncf %76 : vector<8x8xf32> to vector<8x8xbf16>
    %c2 = arith.constant 2 : index
    %c0_38 = arith.constant 0 : index
    %c0_39 = arith.constant 0 : index
    %78 = vector.load %arg13[%c2, %c0_38, %c0_39] : memref<8x8x8xbf16, #tpu.memory_space<vmem>>, vector<1x8x8xbf16>
    %79 = vector.shape_cast %78 : vector<1x8x8xbf16> to vector<8x8xbf16>
    %80 = vector.shape_cast %77 : vector<8x8xbf16> to vector<1x8x8xbf16>
    tpu.vector_store %arg13[%c2, %c0_38, %c0_39], %80 {strides = array<i32>} : memref<8x8x8xbf16, #tpu.memory_space<vmem>>, vector<1x8x8xbf16>,
    %81 = vector.extract_strided_slice %39 {offsets = [0, 48], sizes = [8, 8], strides = [1, 1]} : vector<16x96xf32> to vector<8x8xf32>
    %82 = arith.truncf %81 : vector<8x8xf32> to vector<8x8xbf16>
    %c2_40 = arith.constant 2 : index
    %c0_41 = arith.constant 0 : index
    %c0_42 = arith.constant 0 : index
    %83 = vector.load %arg14[%c2_40, %c0_41, %c0_42] : memref<8x8x8xbf16, #tpu.memory_space<vmem>>, vector<1x8x8xbf16>
    %84 = vector.shape_cast %83 : vector<1x8x8xbf16> to vector<8x8xbf16>
    %85 = vector.shape_cast %82 : vector<8x8xbf16> to vector<1x8x8xbf16>
    tpu.vector_store %arg14[%c2_40, %c0_41, %c0_42], %85 {strides = array<i32>} : memref<8x8x8xbf16, #tpu.memory_space<vmem>>, vector<1x8x8xbf16>,
    %86 = vector.extract_strided_slice %39 {offsets = [0, 80], sizes = [8, 8], strides = [1, 1]} : vector<16x96xf32> to vector<8x8xf32>
    %87 = arith.truncf %86 : vector<8x8xf32> to vector<8x8xbf16>
    %c2_43 = arith.constant 2 : index
    %c0_44 = arith.constant 0 : index
    %c0_45 = arith.constant 0 : index
    %88 = vector.load %arg15[%c2_43, %c0_44, %c0_45] : memref<8x8x8xbf16, #tpu.memory_space<vmem>>, vector<1x8x8xbf16>
    %89 = vector.shape_cast %88 : vector<1x8x8xbf16> to vector<8x8xbf16>
    %90 = vector.shape_cast %87 : vector<8x8xbf16> to vector<1x8x8xbf16>
    tpu.vector_store %arg15[%c2_43, %c0_44, %c0_45], %90 {strides = array<i32>} : memref<8x8x8xbf16, #tpu.memory_space<vmem>>, vector<1x8x8xbf16>,
    %91 = vector.extract_strided_slice %39 {offsets = [0, 24], sizes = [8, 8], strides = [1, 1]} : vector<16x96xf32> to vector<8x8xf32>
    %cst_46 = arith.constant 0.353553385 : f32
    %92 = vector.broadcast %cst_46 : f32 to vector<8x8xf32>
    %93 = arith.mulf %91, %92 : vector<8x8xf32>
    %94 = arith.truncf %93 : vector<8x8xf32> to vector<8x8xbf16>
    %c3 = arith.constant 3 : index
    %c0_47 = arith.constant 0 : index
    %c0_48 = arith.constant 0 : index
    %95 = vector.load %arg13[%c3, %c0_47, %c0_48] : memref<8x8x8xbf16, #tpu.memory_space<vmem>>, vector<1x8x8xbf16>
    %96 = vector.shape_cast %95 : vector<1x8x8xbf16> to vector<8x8xbf16>
    %97 = vector.shape_cast %94 : vector<8x8xbf16> to vector<1x8x8xbf16>
    tpu.vector_store %arg13[%c3, %c0_47, %c0_48], %97 {strides = array<i32>} : memref<8x8x8xbf16, #tpu.memory_space<vmem>>, vector<1x8x8xbf16>,
    %98 = vector.extract_strided_slice %39 {offsets = [0, 56], sizes = [8, 8], strides = [1, 1]} : vector<16x96xf32> to vector<8x8xf32>
    %99 = arith.truncf %98 : vector<8x8xf32> to vector<8x8xbf16>
    %c3_49 = arith.constant 3 : index
    %c0_50 = arith.constant 0 : index
    %c0_51 = arith.constant 0 : index
    %100 = vector.load %arg14[%c3_49, %c0_50, %c0_51] : memref<8x8x8xbf16, #tpu.memory_space<vmem>>, vector<1x8x8xbf16>
    %101 = vector.shape_cast %100 : vector<1x8x8xbf16> to vector<8x8xbf16>
    %102 = vector.shape_cast %99 : vector<8x8xbf16> to vector<1x8x8xbf16>
    tpu.vector_store %arg14[%c3_49, %c0_50, %c0_51], %102 {strides = array<i32>} : memref<8x8x8xbf16, #tpu.memory_space<vmem>>, vector<1x8x8xbf16>,
    %103 = vector.extract_strided_slice %39 {offsets = [0, 88], sizes = [8, 8], strides = [1, 1]} : vector<16x96xf32> to vector<8x8xf32>
    %104 = arith.truncf %103 : vector<8x8xf32> to vector<8x8xbf16>
    %c3_52 = arith.constant 3 : index
    %c0_53 = arith.constant 0 : index
    %c0_54 = arith.constant 0 : index
    %105 = vector.load %arg15[%c3_52, %c0_53, %c0_54] : memref<8x8x8xbf16, #tpu.memory_space<vmem>>, vector<1x8x8xbf16>
    %106 = vector.shape_cast %105 : vector<1x8x8xbf16> to vector<8x8xbf16>
    %107 = vector.shape_cast %104 : vector<8x8xbf16> to vector<1x8x8xbf16>
    tpu.vector_store %arg15[%c3_52, %c0_53, %c0_54], %107 {strides = array<i32>} : memref<8x8x8xbf16, #tpu.memory_space<vmem>>, vector<1x8x8xbf16>,
    %108 = vector.extract_strided_slice %39 {offsets = [8, 0], sizes = [8, 8], strides = [1, 1]} : vector<16x96xf32> to vector<8x8xf32>
    %cst_55 = arith.constant 0.353553385 : f32
    %109 = vector.broadcast %cst_55 : f32 to vector<8x8xf32>
    %110 = arith.mulf %108, %109 : vector<8x8xf32>
    %111 = arith.truncf %110 : vector<8x8xf32> to vector<8x8xbf16>
    %c4 = arith.constant 4 : index
    %c0_56 = arith.constant 0 : index
    %c0_57 = arith.constant 0 : index
    %112 = vector.load %arg13[%c4, %c0_56, %c0_57] : memref<8x8x8xbf16, #tpu.memory_space<vmem>>, vector<1x8x8xbf16>
    %113 = vector.shape_cast %112 : vector<1x8x8xbf16> to vector<8x8xbf16>
    %114 = vector.shape_cast %111 : vector<8x8xbf16> to vector<1x8x8xbf16>
    tpu.vector_store %arg13[%c4, %c0_56, %c0_57], %114 {strides = array<i32>} : memref<8x8x8xbf16, #tpu.memory_space<vmem>>, vector<1x8x8xbf16>,
    %115 = vector.extract_strided_slice %39 {offsets = [8, 32], sizes = [8, 8], strides = [1, 1]} : vector<16x96xf32> to vector<8x8xf32>
    %116 = arith.truncf %115 : vector<8x8xf32> to vector<8x8xbf16>
    %c4_58 = arith.constant 4 : index
    %c0_59 = arith.constant 0 : index
    %c0_60 = arith.constant 0 : index
    %117 = vector.load %arg14[%c4_58, %c0_59, %c0_60] : memref<8x8x8xbf16, #tpu.memory_space<vmem>>, vector<1x8x8xbf16>
    %118 = vector.shape_cast %117 : vector<1x8x8xbf16> to vector<8x8xbf16>
    %119 = vector.shape_cast %116 : vector<8x8xbf16> to vector<1x8x8xbf16>
    tpu.vector_store %arg14[%c4_58, %c0_59, %c0_60], %119 {strides = array<i32>} : memref<8x8x8xbf16, #tpu.memory_space<vmem>>, vector<1x8x8xbf16>,
    %120 = vector.extract_strided_slice %39 {offsets = [8, 64], sizes = [8, 8], strides = [1, 1]} : vector<16x96xf32> to vector<8x8xf32>
    %121 = arith.truncf %120 : vector<8x8xf32> to vector<8x8xbf16>
    %c4_61 = arith.constant 4 : index
    %c0_62 = arith.constant 0 : index
    %c0_63 = arith.constant 0 : index
    %122 = vector.load %arg15[%c4_61, %c0_62, %c0_63] : memref<8x8x8xbf16, #tpu.memory_space<vmem>>, vector<1x8x8xbf16>
    %123 = vector.shape_cast %122 : vector<1x8x8xbf16> to vector<8x8xbf16>
    %124 = vector.shape_cast %121 : vector<8x8xbf16> to vector<1x8x8xbf16>
    tpu.vector_store %arg15[%c4_61, %c0_62, %c0_63], %124 {strides = array<i32>} : memref<8x8x8xbf16, #tpu.memory_space<vmem>>, vector<1x8x8xbf16>,
    %125 = vector.extract_strided_slice %39 {offsets = [8, 8], sizes = [8, 8], strides = [1, 1]} : vector<16x96xf32> to vector<8x8xf32>
    %cst_64 = arith.constant 0.353553385 : f32
    %126 = vector.broadcast %cst_64 : f32 to vector<8x8xf32>
    %127 = arith.mulf %125, %126 : vector<8x8xf32>
    %128 = arith.truncf %127 : vector<8x8xf32> to vector<8x8xbf16>
    %c5 = arith.constant 5 : index
    %c0_65 = arith.constant 0 : index
    %c0_66 = arith.constant 0 : index
    %129 = vector.load %arg13[%c5, %c0_65, %c0_66] : memref<8x8x8xbf16, #tpu.memory_space<vmem>>, vector<1x8x8xbf16>
    %130 = vector.shape_cast %129 : vector<1x8x8xbf16> to vector<8x8xbf16>
    %131 = vector.shape_cast %128 : vector<8x8xbf16> to vector<1x8x8xbf16>
    tpu.vector_store %arg13[%c5, %c0_65, %c0_66], %131 {strides = array<i32>} : memref<8x8x8xbf16, #tpu.memory_space<vmem>>, vector<1x8x8xbf16>,
    %132 = vector.extract_strided_slice %39 {offsets = [8, 40], sizes = [8, 8], strides = [1, 1]} : vector<16x96xf32> to vector<8x8xf32>
    %133 = arith.truncf %132 : vector<8x8xf32> to vector<8x8xbf16>
    %c5_67 = arith.constant 5 : index
    %c0_68 = arith.constant 0 : index
    %c0_69 = arith.constant 0 : index
    %134 = vector.load %arg14[%c5_67, %c0_68, %c0_69] : memref<8x8x8xbf16, #tpu.memory_space<vmem>>, vector<1x8x8xbf16>
    %135 = vector.shape_cast %134 : vector<1x8x8xbf16> to vector<8x8xbf16>
    %136 = vector.shape_cast %133 : vector<8x8xbf16> to vector<1x8x8xbf16>
    tpu.vector_store %arg14[%c5_67, %c0_68, %c0_69], %136 {strides = array<i32>} : memref<8x8x8xbf16, #tpu.memory_space<vmem>>, vector<1x8x8xbf16>,
    %137 = vector.extract_strided_slice %39 {offsets = [8, 72], sizes = [8, 8], strides = [1, 1]} : vector<16x96xf32> to vector<8x8xf32>
    %138 = arith.truncf %137 : vector<8x8xf32> to vector<8x8xbf16>
    %c5_70 = arith.constant 5 : index
    %c0_71 = arith.constant 0 : index
    %c0_72 = arith.constant 0 : index
    %139 = vector.load %arg15[%c5_70, %c0_71, %c0_72] : memref<8x8x8xbf16, #tpu.memory_space<vmem>>, vector<1x8x8xbf16>
    %140 = vector.shape_cast %139 : vector<1x8x8xbf16> to vector<8x8xbf16>
    %141 = vector.shape_cast %138 : vector<8x8xbf16> to vector<1x8x8xbf16>
    tpu.vector_store %arg15[%c5_70, %c0_71, %c0_72], %141 {strides = array<i32>} : memref<8x8x8xbf16, #tpu.memory_space<vmem>>, vector<1x8x8xbf16>,
    %142 = vector.extract_strided_slice %39 {offsets = [8, 16], sizes = [8, 8], strides = [1, 1]} : vector<16x96xf32> to vector<8x8xf32>
    %cst_73 = arith.constant 0.353553385 : f32
    %143 = vector.broadcast %cst_73 : f32 to vector<8x8xf32>
    %144 = arith.mulf %142, %143 : vector<8x8xf32>
    %145 = arith.truncf %144 : vector<8x8xf32> to vector<8x8xbf16>
    %c6 = arith.constant 6 : index
    %c0_74 = arith.constant 0 : index
    %c0_75 = arith.constant 0 : index
    %146 = vector.load %arg13[%c6, %c0_74, %c0_75] : memref<8x8x8xbf16, #tpu.memory_space<vmem>>, vector<1x8x8xbf16>
    %147 = vector.shape_cast %146 : vector<1x8x8xbf16> to vector<8x8xbf16>
    %148 = vector.shape_cast %145 : vector<8x8xbf16> to vector<1x8x8xbf16>
    tpu.vector_store %arg13[%c6, %c0_74, %c0_75], %148 {strides = array<i32>} : memref<8x8x8xbf16, #tpu.memory_space<vmem>>, vector<1x8x8xbf16>,
    %149 = vector.extract_strided_slice %39 {offsets = [8, 48], sizes = [8, 8], strides = [1, 1]} : vector<16x96xf32> to vector<8x8xf32>
    %150 = arith.truncf %149 : vector<8x8xf32> to vector<8x8xbf16>
    %c6_76 = arith.constant 6 : index
    %c0_77 = arith.constant 0 : index
    %c0_78 = arith.constant 0 : index
    %151 = vector.load %arg14[%c6_76, %c0_77, %c0_78] : memref<8x8x8xbf16, #tpu.memory_space<vmem>>, vector<1x8x8xbf16>
    %152 = vector.shape_cast %151 : vector<1x8x8xbf16> to vector<8x8xbf16>
    %153 = vector.shape_cast %150 : vector<8x8xbf16> to vector<1x8x8xbf16>
    tpu.vector_store %arg14[%c6_76, %c0_77, %c0_78], %153 {strides = array<i32>} : memref<8x8x8xbf16, #tpu.memory_space<vmem>>, vector<1x8x8xbf16>,
    %154 = vector.extract_strided_slice %39 {offsets = [8, 80], sizes = [8, 8], strides = [1, 1]} : vector<16x96xf32> to vector<8x8xf32>
    %155 = arith.truncf %154 : vector<8x8xf32> to vector<8x8xbf16>
    %c6_79 = arith.constant 6 : index
    %c0_80 = arith.constant 0 : index
    %c0_81 = arith.constant 0 : index
    %156 = vector.load %arg15[%c6_79, %c0_80, %c0_81] : memref<8x8x8xbf16, #tpu.memory_space<vmem>>, vector<1x8x8xbf16>
    %157 = vector.shape_cast %156 : vector<1x8x8xbf16> to vector<8x8xbf16>
    %158 = vector.shape_cast %155 : vector<8x8xbf16> to vector<1x8x8xbf16>
    tpu.vector_store %arg15[%c6_79, %c0_80, %c0_81], %158 {strides = array<i32>} : memref<8x8x8xbf16, #tpu.memory_space<vmem>>, vector<1x8x8xbf16>,
    %159 = vector.extract_strided_slice %39 {offsets = [8, 24], sizes = [8, 8], strides = [1, 1]} : vector<16x96xf32> to vector<8x8xf32>
    %cst_82 = arith.constant 0.353553385 : f32
    %160 = vector.broadcast %cst_82 : f32 to vector<8x8xf32>
    %161 = arith.mulf %159, %160 : vector<8x8xf32>
    %162 = arith.truncf %161 : vector<8x8xf32> to vector<8x8xbf16>
    %c7 = arith.constant 7 : index
    %c0_83 = arith.constant 0 : index
    %c0_84 = arith.constant 0 : index
    %163 = vector.load %arg13[%c7, %c0_83, %c0_84] : memref<8x8x8xbf16, #tpu.memory_space<vmem>>, vector<1x8x8xbf16>
    %164 = vector.shape_cast %163 : vector<1x8x8xbf16> to vector<8x8xbf16>
    %165 = vector.shape_cast %162 : vector<8x8xbf16> to vector<1x8x8xbf16>
    tpu.vector_store %arg13[%c7, %c0_83, %c0_84], %165 {strides = array<i32>} : memref<8x8x8xbf16, #tpu.memory_space<vmem>>, vector<1x8x8xbf16>,
    %166 = vector.extract_strided_slice %39 {offsets = [8, 56], sizes = [8, 8], strides = [1, 1]} : vector<16x96xf32> to vector<8x8xf32>
    %167 = arith.truncf %166 : vector<8x8xf32> to vector<8x8xbf16>
    %c7_85 = arith.constant 7 : index
    %c0_86 = arith.constant 0 : index
    %c0_87 = arith.constant 0 : index
    %168 = vector.load %arg14[%c7_85, %c0_86, %c0_87] : memref<8x8x8xbf16, #tpu.memory_space<vmem>>, vector<1x8x8xbf16>
    %169 = vector.shape_cast %168 : vector<1x8x8xbf16> to vector<8x8xbf16>
    %170 = vector.shape_cast %167 : vector<8x8xbf16> to vector<1x8x8xbf16>
    tpu.vector_store %arg14[%c7_85, %c0_86, %c0_87], %170 {strides = array<i32>} : memref<8x8x8xbf16, #tpu.memory_space<vmem>>, vector<1x8x8xbf16>,
    %171 = vector.extract_strided_slice %39 {offsets = [8, 88], sizes = [8, 8], strides = [1, 1]} : vector<16x96xf32> to vector<8x8xf32>
    %172 = arith.truncf %171 : vector<8x8xf32> to vector<8x8xbf16>
    %c7_88 = arith.constant 7 : index
    %c0_89 = arith.constant 0 : index
    %c0_90 = arith.constant 0 : index
    %173 = vector.load %arg15[%c7_88, %c0_89, %c0_90] : memref<8x8x8xbf16, #tpu.memory_space<vmem>>, vector<1x8x8xbf16>
    %174 = vector.shape_cast %173 : vector<1x8x8xbf16> to vector<8x8xbf16>
    %175 = vector.shape_cast %172 : vector<8x8xbf16> to vector<1x8x8xbf16>
    tpu.vector_store %arg15[%c7_88, %c0_89, %c0_90], %175 {strides = array<i32>} : memref<8x8x8xbf16, #tpu.memory_space<vmem>>, vector<1x8x8xbf16>,
    %c0_91 = arith.constant 0 : index
    %c0_92 = arith.constant 0 : index
    %c0_93 = arith.constant 0 : index
    %176 = vector.load %arg13[%c0_91, %c0_92, %c0_93] : memref<8x8x8xbf16, #tpu.memory_space<vmem>>, vector<8x8x8xbf16>
    %c0_94 = arith.constant 0 : index
    %c0_95 = arith.constant 0 : index
    %c0_96 = arith.constant 0 : index
    %177 = vector.load %arg14[%c0_94, %c0_95, %c0_96] : memref<8x8x8xbf16, #tpu.memory_space<vmem>>, vector<8x8x8xbf16>
    "tpu.trace_start"() <{level = 10 : i32, message = "hqd,hkd->hqk"}> : () -> ()
    %cst_97 = arith.constant dense<0.000000e+00> : vector<8x8x8xf32>
    %178 = tpu.matmul %176, %177, %cst_97 {dimension_numbers = #tpu.dot_dimension_numbers<[2], [2], [1], [1], [0, 0, 0, 1, 1, 1], [0], [0]>} : vector<8x8x8xbf16>, vector<8x8x8xbf16>, vector<8x8x8xf32> -> vector<8x8x8xf32>
    "tpu.trace_stop"() : () -> ()
    %cst_98 = arith.constant dense<0xFF800000> : vector<8x8xf32>
    %179 = vector.multi_reduction <maximumf>, %178, %cst_98 [2] : vector<8x8x8xf32> to vector<8x8xf32>
    %180 = vector.shape_cast %179 : vector<8x8xf32> to vector<8x8x1xf32>
    %181 = vector.broadcast %180 : vector<8x8x1xf32> to vector<8x8x8xf32>
    %182 = arith.subf %178, %181 : vector<8x8x8xf32>
    %183 = math.exp %182 : vector<8x8x8xf32>
    %cst_99 = arith.constant dense<0.000000e+00> : vector<8x8xf32>
    %184 = vector.multi_reduction <add>, %183, %cst_99 [2] : vector<8x8x8xf32> to vector<8x8xf32>
    %185 = vector.shape_cast %184 : vector<8x8xf32> to vector<8x8x1xf32>
    %186 = tpu.reciprocal %185 {approx = true} : vector<8x8x1xf32> -> vector<8x8x1xf32>
    %187 = vector.broadcast %186 : vector<8x8x1xf32> to vector<8x8x8xf32>
    %188 = arith.mulf %183, %187 : vector<8x8x8xf32>
    %189 = arith.truncf %188 : vector<8x8x8xf32> to vector<8x8x8xbf16>
    %c0_100 = arith.constant 0 : index
    %c0_101 = arith.constant 0 : index
    %c0_102 = arith.constant 0 : index
    %190 = vector.load %arg15[%c0_100, %c0_101, %c0_102] : memref<8x8x8xbf16, #tpu.memory_space<vmem>>, vector<8x8x8xbf16>
    "tpu.trace_start"() <{level = 10 : i32, message = "hqk,hkd->hqd"}> : () -> ()
    %cst_103 = arith.constant dense<0.000000e+00> : vector<8x8x8xf32>
    %191 = tpu.matmul %189, %190, %cst_103 {dimension_numbers = #tpu.dot_dimension_numbers<[2], [1], [1], [2], [0, 0, 0, 1, 1, 2], [0], [0]>} : vector<8x8x8xbf16>, vector<8x8x8xbf16>, vector<8x8x8xf32> -> vector<8x8x8xf32>
    "tpu.trace_stop"() : () -> ()
    %192 = vector.extract_strided_slice %191 {offsets = [0, 0, 0], sizes = [1, 8, 8], strides = [1, 1, 1]} : vector<8x8x8xf32> to vector<1x8x8xf32>
    %193 = vector.shape_cast %192 : vector<1x8x8xf32> to vector<8x8xf32>
    %194 = arith.truncf %193 : vector<8x8xf32> to vector<8x8xbf16>
    %c0_104 = arith.constant 0 : index
    %c0_105 = arith.constant 0 : index
    %195 = vector.load %arg16[%c0_104, %c0_105] : memref<16x32xbf16, #tpu.memory_space<vmem>>, vector<8x8xbf16>
    tpu.vector_store %arg16[%c0_104, %c0_105], %194 {strides = array<i32>} : memref<16x32xbf16, #tpu.memory_space<vmem>>, vector<8x8xbf16>,
    %196 = vector.extract_strided_slice %191 {offsets = [1, 0, 0], sizes = [1, 8, 8], strides = [1, 1, 1]} : vector<8x8x8xf32> to vector<1x8x8xf32>
    %197 = vector.shape_cast %196 : vector<1x8x8xf32> to vector<8x8xf32>
    %198 = arith.truncf %197 : vector<8x8xf32> to vector<8x8xbf16>
    %c0_106 = arith.constant 0 : index
    %c8 = arith.constant 8 : index
    %199 = vector.load %arg16[%c0_106, %c8] : memref<16x32xbf16, #tpu.memory_space<vmem>>, vector<8x8xbf16>
    tpu.vector_store %arg16[%c0_106, %c8], %198 {strides = array<i32>} : memref<16x32xbf16, #tpu.memory_space<vmem>>, vector<8x8xbf16>,
    %200 = vector.extract_strided_slice %191 {offsets = [2, 0, 0], sizes = [1, 8, 8], strides = [1, 1, 1]} : vector<8x8x8xf32> to vector<1x8x8xf32>
    %201 = vector.shape_cast %200 : vector<1x8x8xf32> to vector<8x8xf32>
    %202 = arith.truncf %201 : vector<8x8xf32> to vector<8x8xbf16>
    %c0_107 = arith.constant 0 : index
    %c16 = arith.constant 16 : index
    %203 = vector.load %arg16[%c0_107, %c16] : memref<16x32xbf16, #tpu.memory_space<vmem>>, vector<8x8xbf16>
    tpu.vector_store %arg16[%c0_107, %c16], %202 {strides = array<i32>} : memref<16x32xbf16, #tpu.memory_space<vmem>>, vector<8x8xbf16>,
    %204 = vector.extract_strided_slice %191 {offsets = [3, 0, 0], sizes = [1, 8, 8], strides = [1, 1, 1]} : vector<8x8x8xf32> to vector<1x8x8xf32>
    %205 = vector.shape_cast %204 : vector<1x8x8xf32> to vector<8x8xf32>
    %206 = arith.truncf %205 : vector<8x8xf32> to vector<8x8xbf16>
    %c0_108 = arith.constant 0 : index
    %c24 = arith.constant 24 : index
    %207 = vector.load %arg16[%c0_108, %c24] : memref<16x32xbf16, #tpu.memory_space<vmem>>, vector<8x8xbf16>
    tpu.vector_store %arg16[%c0_108, %c24], %206 {strides = array<i32>} : memref<16x32xbf16, #tpu.memory_space<vmem>>, vector<8x8xbf16>,
    %208 = vector.extract_strided_slice %191 {offsets = [4, 0, 0], sizes = [1, 8, 8], strides = [1, 1, 1]} : vector<8x8x8xf32> to vector<1x8x8xf32>
    %209 = vector.shape_cast %208 : vector<1x8x8xf32> to vector<8x8xf32>
    %210 = arith.truncf %209 : vector<8x8xf32> to vector<8x8xbf16>
    %c8_109 = arith.constant 8 : index
    %c0_110 = arith.constant 0 : index
    %211 = vector.load %arg16[%c8_109, %c0_110] : memref<16x32xbf16, #tpu.memory_space<vmem>>, vector<8x8xbf16>
    tpu.vector_store %arg16[%c8_109, %c0_110], %210 {strides = array<i32>} : memref<16x32xbf16, #tpu.memory_space<vmem>>, vector<8x8xbf16>,
    %212 = vector.extract_strided_slice %191 {offsets = [5, 0, 0], sizes = [1, 8, 8], strides = [1, 1, 1]} : vector<8x8x8xf32> to vector<1x8x8xf32>
    %213 = vector.shape_cast %212 : vector<1x8x8xf32> to vector<8x8xf32>
    %214 = arith.truncf %213 : vector<8x8xf32> to vector<8x8xbf16>
    %c8_111 = arith.constant 8 : index
    %c8_112 = arith.constant 8 : index
    %215 = vector.load %arg16[%c8_111, %c8_112] : memref<16x32xbf16, #tpu.memory_space<vmem>>, vector<8x8xbf16>
    tpu.vector_store %arg16[%c8_111, %c8_112], %214 {strides = array<i32>} : memref<16x32xbf16, #tpu.memory_space<vmem>>, vector<8x8xbf16>,
    %216 = vector.extract_strided_slice %191 {offsets = [6, 0, 0], sizes = [1, 8, 8], strides = [1, 1, 1]} : vector<8x8x8xf32> to vector<1x8x8xf32>
    %217 = vector.shape_cast %216 : vector<1x8x8xf32> to vector<8x8xf32>
    %218 = arith.truncf %217 : vector<8x8xf32> to vector<8x8xbf16>
    %c8_113 = arith.constant 8 : index
    %c16_114 = arith.constant 16 : index
    %219 = vector.load %arg16[%c8_113, %c16_114] : memref<16x32xbf16, #tpu.memory_space<vmem>>, vector<8x8xbf16>
    tpu.vector_store %arg16[%c8_113, %c16_114], %218 {strides = array<i32>} : memref<16x32xbf16, #tpu.memory_space<vmem>>, vector<8x8xbf16>,
    %220 = vector.extract_strided_slice %191 {offsets = [7, 0, 0], sizes = [1, 8, 8], strides = [1, 1, 1]} : vector<8x8x8xf32> to vector<1x8x8xf32>
    %221 = vector.shape_cast %220 : vector<1x8x8xf32> to vector<8x8xf32>
    %222 = arith.truncf %221 : vector<8x8xf32> to vector<8x8xbf16>
    %c8_115 = arith.constant 8 : index
    %c24_116 = arith.constant 24 : index
    %223 = vector.load %arg16[%c8_115, %c24_116] : memref<16x32xbf16, #tpu.memory_space<vmem>>, vector<8x8xbf16>
    tpu.vector_store %arg16[%c8_115, %c24_116], %222 {strides = array<i32>} : memref<16x32xbf16, #tpu.memory_space<vmem>>, vector<8x8xbf16>,
    %c0_117 = arith.constant 0 : index
    %c0_118 = arith.constant 0 : index
    %224 = vector.load %arg16[%c0_117, %c0_118] : memref<16x32xbf16, #tpu.memory_space<vmem>>, vector<16x32xbf16>
    %c0_119 = arith.constant 0 : index
    %c0_120 = arith.constant 0 : index
    %225 = vector.load %arg6[%c0_119, %c0_120] : memref<32x32xbf16, #tpu.memory_space<vmem>>, vector<32x32xbf16>
    %cst_121 = arith.constant dense<0.000000e+00> : vector<16x32xf32>
    %226 = tpu.matmul %224, %225, %cst_121 {dimension_numbers = #tpu.dot_dimension_numbers<[1], [0], [0], [1], [0, 0, 1, 1], [], []>} : vector<16x32xbf16>, vector<32x32xbf16>, vector<16x32xf32> -> vector<16x32xf32>
    %c0_122 = arith.constant 0 : index
    %c0_123 = arith.constant 0 : index
    %227 = vector.load %arg7[%c0_122, %c0_123] : memref<1x32xf32, #tpu.memory_space<vmem>>, vector<1x32xf32>
    %228 = vector.broadcast %227 : vector<1x32xf32> to vector<16x32xf32>
    %229 = arith.addf %226, %228 : vector<16x32xf32>
    %230 = vector.shape_cast %229 : vector<16x32xf32> to vector<2x8x32xf32>
    %231 = vector.broadcast %5 : vector<2x1x32xf32> to vector<2x8x32xf32>
    %232 = arith.mulf %231, %230 : vector<2x8x32xf32>
    %233 = arith.addf %0, %232 : vector<2x8x32xf32>
    %cst_124 = arith.constant dense<0.000000e+00> : vector<2x8xf32>
    %234 = vector.multi_reduction <add>, %233, %cst_124 [2] : vector<2x8x32xf32> to vector<2x8xf32>
    %235 = vector.shape_cast %234 : vector<2x8xf32> to vector<2x8x1xf32>
    %cst_125 = arith.constant 3.200000e+01 : f32
    %236 = vector.broadcast %cst_125 : f32 to vector<2x8x1xf32>
    %237 = arith.divf %235, %236 : vector<2x8x1xf32>
    %238 = vector.broadcast %237 : vector<2x8x1xf32> to vector<2x8x32xf32>
    %239 = arith.subf %233, %238 : vector<2x8x32xf32>
    %240 = arith.mulf %239, %239 : vector<2x8x32xf32>
    %cst_126 = arith.constant dense<0.000000e+00> : vector<2x8xf32>
    %241 = vector.multi_reduction <add>, %240, %cst_126 [2] : vector<2x8x32xf32> to vector<2x8xf32>
    %242 = vector.shape_cast %241 : vector<2x8xf32> to vector<2x8x1xf32>
    %cst_127 = arith.constant 3.200000e+01 : f32
    %243 = vector.broadcast %cst_127 : f32 to vector<2x8x1xf32>
    %244 = arith.divf %242, %243 : vector<2x8x1xf32>
    %245 = vector.broadcast %237 : vector<2x8x1xf32> to vector<2x8x32xf32>
    %246 = arith.subf %233, %245 : vector<2x8x32xf32>
    %cst_128 = arith.constant 9.99999997E-7 : f32
    %247 = vector.broadcast %cst_128 : f32 to vector<2x8x1xf32>
    %248 = arith.addf %244, %247 : vector<2x8x1xf32>
    %249 = math.rsqrt %248 : vector<2x8x1xf32>
    %250 = vector.broadcast %249 : vector<2x8x1xf32> to vector<2x8x32xf32>
    %251 = arith.mulf %246, %250 : vector<2x8x32xf32>
    %cst_129 = arith.constant 1.000000e+00 : f32
    %252 = vector.broadcast %cst_129 : f32 to vector<2x1x32xf32>
    %253 = arith.addf %252, %7 : vector<2x1x32xf32>
    %254 = vector.broadcast %253 : vector<2x1x32xf32> to vector<2x8x32xf32>
    %255 = arith.mulf %251, %254 : vector<2x8x32xf32>
    %256 = vector.broadcast %6 : vector<2x1x32xf32> to vector<2x8x32xf32>
    %257 = arith.addf %255, %256 : vector<2x8x32xf32>
    %258 = vector.shape_cast %257 : vector<2x8x32xf32> to vector<16x32xf32>
    %259 = arith.truncf %258 : vector<16x32xf32> to vector<16x32xbf16>
    %c0_130 = arith.constant 0 : index
    %c0_131 = arith.constant 0 : index
    %260 = vector.load %arg8[%c0_130, %c0_131] : memref<32x128xbf16, #tpu.memory_space<vmem>>, vector<32x128xbf16>
    %cst_132 = arith.constant dense<0.000000e+00> : vector<16x128xf32>
    %261 = tpu.matmul %259, %260, %cst_132 {dimension_numbers = #tpu.dot_dimension_numbers<[1], [0], [0], [1], [0, 0, 1, 1], [], []>} : vector<16x32xbf16>, vector<32x128xbf16>, vector<16x128xf32> -> vector<16x128xf32>
    %c0_133 = arith.constant 0 : index
    %c0_134 = arith.constant 0 : index
    %262 = vector.load %arg9[%c0_133, %c0_134] : memref<1x128xf32, #tpu.memory_space<vmem>>, vector<1x128xf32>
    %263 = vector.broadcast %262 : vector<1x128xf32> to vector<16x128xf32>
    %264 = arith.addf %261, %263 : vector<16x128xf32>
    %cst_135 = arith.constant 5.000000e-01 : f32
    %265 = vector.broadcast %cst_135 : f32 to vector<16x128xf32>
    %266 = arith.mulf %265, %264 : vector<16x128xf32>
    %cst_136 = arith.constant 4.471500e-02 : f32
    %267 = vector.broadcast %cst_136 : f32 to vector<16x128xf32>
    %268 = arith.mulf %267, %264 : vector<16x128xf32>
    %269 = arith.mulf %268, %264 : vector<16x128xf32>
    %270 = arith.mulf %269, %264 : vector<16x128xf32>
    %271 = arith.addf %264, %270 : vector<16x128xf32>
    %cst_137 = arith.constant 0.797884583 : f32
    %272 = vector.broadcast %cst_137 : f32 to vector<16x128xf32>
    %273 = arith.mulf %272, %271 : vector<16x128xf32>
    %274 = math.tanh %273 : vector<16x128xf32>
    %cst_138 = arith.constant 1.000000e+00 : f32
    %275 = vector.broadcast %cst_138 : f32 to vector<16x128xf32>
    %276 = arith.addf %275, %274 : vector<16x128xf32>
    %277 = arith.mulf %266, %276 : vector<16x128xf32>
    %278 = arith.truncf %277 : vector<16x128xf32> to vector<16x128xbf16>
    %c0_139 = arith.constant 0 : index
    %c0_140 = arith.constant 0 : index
    %279 = vector.load %arg10[%c0_139, %c0_140] : memref<128x32xbf16, #tpu.memory_space<vmem>>, vector<128x32xbf16>
    %cst_141 = arith.constant dense<0.000000e+00> : vector<16x32xf32>
    %280 = tpu.matmul %278, %279, %cst_141 {dimension_numbers = #tpu.dot_dimension_numbers<[1], [0], [0], [1], [0, 0, 1, 1], [], []>} : vector<16x128xbf16>, vector<128x32xbf16>, vector<16x32xf32> -> vector<16x32xf32>
    %c0_142 = arith.constant 0 : index
    %c0_143 = arith.constant 0 : index
    %281 = vector.load %arg11[%c0_142, %c0_143] : memref<1x32xf32, #tpu.memory_space<vmem>>, vector<1x32xf32>
    %282 = vector.broadcast %281 : vector<1x32xf32> to vector<16x32xf32>
    %283 = arith.addf %280, %282 : vector<16x32xf32>
    %284 = vector.shape_cast %283 : vector<16x32xf32> to vector<2x8x32xf32>
    %285 = vector.broadcast %8 : vector<2x1x32xf32> to vector<2x8x32xf32>
    %286 = arith.mulf %285, %284 : vector<2x8x32xf32>
    %287 = arith.addf %233, %286 : vector<2x8x32xf32>
    %c0_144 = arith.constant 0 : index
    %c0_145 = arith.constant 0 : index
    %c0_146 = arith.constant 0 : index
    %288 = vector.load %arg12[%c0_144, %c0_145, %c0_146] : memref<2x8x32xf32, #tpu.memory_space<vmem>>, vector<2x8x32xf32>
    tpu.vector_store %arg12[%c0_144, %c0_145, %c0_146], %287 {strides = array<i32>} : memref<2x8x32xf32, #tpu.memory_space<vmem>>, vector<2x8x32xf32>,
    return
  }
  func.func @transform_0(%arg0: i32) -> (i32, i32, i32) {
    %c0_i32 = arith.constant 0 : i32
    %c0_i32_0 = arith.constant 0 : i32
    %c0_i32_1 = arith.constant 0 : i32
    return %arg0, %c0_i32, %c0_i32_0 : i32, i32, i32
  }
  func.func @transform_1(%arg0: i32) -> (i32, i32, i32) {
    %c0_i32 = arith.constant 0 : i32
    %c0_i32_0 = arith.constant 0 : i32
    %c0_i32_1 = arith.constant 0 : i32
    return %arg0, %c0_i32, %c0_i32_0 : i32, i32, i32
  }
  func.func @transform_2(%arg0: i32) -> (i32, i32, i32) {
    %c0_i32 = arith.constant 0 : i32
    %c0_i32_0 = arith.constant 0 : i32
    %c0_i32_1 = arith.constant 0 : i32
    return %arg0, %c0_i32, %c0_i32_0 : i32, i32, i32
  }
  func.func @transform_3(%arg0: i32) -> (i32, i32) {
    %c0_i32 = arith.constant 0 : i32
    %c0_i32_0 = arith.constant 0 : i32
    %c0_i32_1 = arith.constant 0 : i32
    return %c0_i32, %c0_i32_0 : i32, i32
  }
  func.func @transform_4(%arg0: i32) -> (i32, i32) {
    %c0_i32 = arith.constant 0 : i32
    %c0_i32_0 = arith.constant 0 : i32
    %c0_i32_1 = arith.constant 0 : i32
    return %c0_i32, %c0_i32_0 : i32, i32
  }
  func.func @transform_5(%arg0: i32) -> (i32, i32) {
    %c0_i32 = arith.constant 0 : i32
    %c0_i32_0 = arith.constant 0 : i32
    %c0_i32_1 = arith.constant 0 : i32
    return %c0_i32, %c0_i32_0 : i32, i32
  }
  func.func @transform_6(%arg0: i32) -> (i32, i32) {
    %c0_i32 = arith.constant 0 : i32
    %c0_i32_0 = arith.constant 0 : i32
    %c0_i32_1 = arith.constant 0 : i32
    return %c0_i32, %c0_i32_0 : i32, i32
  }
  func.func @transform_7(%arg0: i32) -> (i32, i32) {
    %c0_i32 = arith.constant 0 : i32
    %c0_i32_0 = arith.constant 0 : i32
    %c0_i32_1 = arith.constant 0 : i32
    return %c0_i32, %c0_i32_0 : i32, i32
  }
  func.func @transform_8(%arg0: i32) -> (i32, i32) {
    %c0_i32 = arith.constant 0 : i32
    %c0_i32_0 = arith.constant 0 : i32
    %c0_i32_1 = arith.constant 0 : i32
    return %c0_i32, %c0_i32_0 : i32, i32
  }
  func.func @transform_9(%arg0: i32) -> (i32, i32) {
    %c0_i32 = arith.constant 0 : i32
    %c0_i32_0 = arith.constant 0 : i32
    %c0_i32_1 = arith.constant 0 : i32
    return %c0_i32, %c0_i32_0 : i32, i32
  }
  func.func @transform_10(%arg0: i32) -> (i32, i32) {
    %c0_i32 = arith.constant 0 : i32
    %c0_i32_0 = arith.constant 0 : i32
    %c0_i32_1 = arith.constant 0 : i32
    return %c0_i32, %c0_i32_0 : i32, i32
  }
  func.func @transform_11(%arg0: i32) -> (i32, i32, i32) {
    %c0_i32 = arith.constant 0 : i32
    %c0_i32_0 = arith.constant 0 : i32
    %c0_i32_1 = arith.constant 0 : i32
    return %arg0, %c0_i32, %c0_i32_0 : i32, i32, i32
  }
}

</mosaic_0001>

<llo_original>
// kernel: tpu_custom_call.1
$region0: #{tpu_custom_call.1}
  #allocation0 [shape = 'u32[]', space=smem, size = 0x4, offset = 0x4, fixed_abs, tag = 'smem constant byte address 0x4 - core index']
  #allocation1 [shape = 'u32[144,128]{1,0:T(1,128)}', space=vmem, size = 0x12000, scoped, tag = 'internal scratch']
  #allocation2 [shape = 'bf16[8,8,8]{2,1,0:T(8,128)(2,1)}', space=vmem, size = 0x4000, scoped, tag = 'scratch operand']
  #allocation3 [shape = 'bf16[8,8,8]{2,1,0:T(8,128)(2,1)}', space=vmem, size = 0x4000, scoped, tag = 'scratch operand']
  #allocation4 [shape = 'bf16[8,8,8]{2,1,0:T(8,128)(2,1)}', space=vmem, size = 0x4000, scoped, tag = 'scratch operand']
  #allocation5 [shape = 'bf16[16,32]{1,0:T(16,128)(2,1)}', space=vmem, size = 0x1000, scoped, tag = 'scratch operand']
  %s0 = inlined_call_operand.vmem [shape: f32[2,8,32], index: 0, kind: input, shape index: {}]
  %s1 = inlined_call_operand.vmem [shape: f32[2,1,96], index: 1, kind: input, shape index: {}]
  %s2 = inlined_call_operand.vmem [shape: f32[2,1,96], index: 2, kind: input, shape index: {}]
  %s3 = inlined_call_operand.vmem [shape: bf16[32,96], index: 3, kind: input, shape index: {}]
  %s4 = inlined_call_operand.vmem [shape: f32[1,96], index: 4, kind: input, shape index: {}]
  %s5 = inlined_call_operand.vmem [shape: bf16[32,32], index: 5, kind: input, shape index: {}]
  %s6 = inlined_call_operand.vmem [shape: f32[1,32], index: 6, kind: input, shape index: {}]
  %s7 = inlined_call_operand.vmem [shape: bf16[32,128], index: 7, kind: input, shape index: {}]
  %s8 = inlined_call_operand.vmem [shape: f32[1,128], index: 8, kind: input, shape index: {}]
  %s9 = inlined_call_operand.vmem [shape: bf16[128,32], index: 9, kind: input, shape index: {}]
  %s10 = inlined_call_operand.vmem [shape: f32[1,32], index: 10, kind: input, shape index: {}]
  %s11 = inlined_call_operand.hbm [shape: f32[2,8,32], index: 11, kind: output, shape index: {}]
  %s12 = sld [smem:[#allocation0]]
  $region54: #{tpu_custom_call.1} parent=0
    _
  %s14 = ssub.s32 1, %s12
  %s15 = scalar_select 0, %s14, %s12
  $region1: #{tpu_custom_call.1} parent=0
    #allocation6 [shape = 'u8[8192]{0}', space=vmem, size = 0x2000, scoped, tag = 'output window, operand 0, single buffered']
    #allocation7 [shape = 's32[1]{0}', space=sflag, size = 0x4, scoped, tag = 'scoped memory for tpu_custom_call.1']
    %16 = vsyncpa [#allocation7], 0
    // Predicated region
    $region2: #{tpu_custom_call.1} parent=1 // pred_check
      _
    $region3: #{tpu_custom_call.1} parent=1 // pred_check_branch
      %18 = sbr.rel (0) target = $region5
    $region4: #{tpu_custom_call.1} parent=1 // pred_region
      _
    $region5: #{tpu_custom_call.1} parent=1 // pred_fallthru
      _
    // Predicated region
    $region6: #{tpu_custom_call.1} parent=1 // pred_check
      _
    $region7: #{tpu_custom_call.1} parent=1 // pred_check_branch
      %20 = sbr.rel (0) target = $region9
    $region8: #{tpu_custom_call.1} parent=1 // pred_region
      _
    $region9: #{tpu_custom_call.1} parent=1 // pred_fallthru
      _
    // Predicated region
    $region10: #{tpu_custom_call.1} parent=1 // pred_check
      _
    $region11: #{tpu_custom_call.1} parent=1 // pred_check_branch
      %22 = sbr.rel (0) target = $region13
    $region12: #{tpu_custom_call.1} parent=1 // pred_region
      _
    $region13: #{tpu_custom_call.1} parent=1 // pred_fallthru
      _
    // Predicated region
    $region14: #{tpu_custom_call.1} parent=1 // pred_check
      _
    $region15: #{tpu_custom_call.1} parent=1 // pred_check_branch
      %24 = sbr.rel (0) target = $region17
    $region16: #{tpu_custom_call.1} parent=1 // pred_region
      _
    $region17: #{tpu_custom_call.1} parent=1 // pred_fallthru
      _
    // Predicated region
    $region18: #{tpu_custom_call.1} parent=1 // pred_check
      _
    $region19: #{tpu_custom_call.1} parent=1 // pred_check_branch
      %26 = sbr.rel (0) target = $region21
    $region20: #{tpu_custom_call.1} parent=1 // pred_region
      _
    $region21: #{tpu_custom_call.1} parent=1 // pred_fallthru
      _
    // Predicated region
    $region22: #{tpu_custom_call.1} parent=1 // pred_check
      _
    $region23: #{tpu_custom_call.1} parent=1 // pred_check_branch
      %28 = sbr.rel (0) target = $region25
    $region24: #{tpu_custom_call.1} parent=1 // pred_region
      _
    $region25: #{tpu_custom_call.1} parent=1 // pred_fallthru
      _
    // Predicated region
    $region26: #{tpu_custom_call.1} parent=1 // pred_check
      _
    $region27: #{tpu_custom_call.1} parent=1 // pred_check_branch
      %30 = sbr.rel (0) target = $region29
    $region28: #{tpu_custom_call.1} parent=1 // pred_region
      _
    $region29: #{tpu_custom_call.1} parent=1 // pred_fallthru
      _
    // Predicated region
    $region30: #{tpu_custom_call.1} parent=1 // pred_check
      _
    $region31: #{tpu_custom_call.1} parent=1 // pred_check_branch
      %32 = sbr.rel (0) target = $region33
    $region32: #{tpu_custom_call.1} parent=1 // pred_region
      _
    $region33: #{tpu_custom_call.1} parent=1 // pred_fallthru
      _
    // Predicated region
    $region34: #{tpu_custom_call.1} parent=1 // pred_check
      _
    $region35: #{tpu_custom_call.1} parent=1 // pred_check_branch
      %34 = sbr.rel (0) target = $region37
    $region36: #{tpu_custom_call.1} parent=1 // pred_region
      _
    $region37: #{tpu_custom_call.1} parent=1 // pred_fallthru
      _
    // Predicated region
    $region38: #{tpu_custom_call.1} parent=1 // pred_check
      _
    $region39: #{tpu_custom_call.1} parent=1 // pred_check_branch
      %36 = sbr.rel (0) target = $region41
    $region40: #{tpu_custom_call.1} parent=1 // pred_region
      _
    $region41: #{tpu_custom_call.1} parent=1 // pred_fallthru
      _
    // Predicated region
    $region42: #{tpu_custom_call.1} parent=1 // pred_check
      _
    $region43: #{tpu_custom_call.1} parent=1 // pred_check_branch
      %38 = sbr.rel (0) target = $region45
    $region44: #{tpu_custom_call.1} parent=1 // pred_region
      _
    $region45: #{tpu_custom_call.1} parent=1 // pred_fallthru
      _
    %v40 = vld [vmem:[%s0] sm:$0xff]
    %v41 = vld [vmem:[%s0 + $0x8] sm:$0xff]
    %v42 = vld [vmem:[%s1] sm:$0x1]
    %v43 = vld [vmem:[%s1 + $0x1] sm:$0x1]
    %v44 = vld [vmem:[%s2] sm:$0x1]
    %v45 = vld [vmem:[%s2 + $0x1] sm:$0x1]
    %vm46 = vcmask 261120
    %v47 = vsel %vm46, %v40, 0.0
    %48 = vadd.xlane.f32.xlu0 %v47
    %v49 = vpop.xlane.xlu0 %48
    %v50 = vsel %vm46, %v41, 0.0
    %51 = vadd.xlane.f32.xlu0 %v50
    %v52 = vpop.xlane.xlu0 %51
    %v53 = vrcp.pop 32.0
    %v54 = vmul.f32 %v49, %v53
    %v55 = vmul.f32 %v52, %v53
    %v56 = vsub.f32 %v40, %v54
    %v57 = vsub.f32 %v41, %v55
    %v58 = vmul.f32 %v56, %v56
    %v59 = vmul.f32 %v57, %v57
    %v60 = vsel %vm46, %v58, 0.0
    %61 = vadd.xlane.f32.xlu0 %v60
    %v62 = vpop.xlane.xlu0 %61
    %v63 = vsel %vm46, %v59, 0.0
    %64 = vadd.xlane.f32.xlu0 %v63
    %v65 = vpop.xlane.xlu0 %64
    %v66 = vmul.f32 %v62, %v53
    %v67 = vmul.f32 %v65, %v53
    %v68 = vadd.f32 %v66, 1e-06
    %v69 = vadd.f32 %v67, 1e-06
    %v70 = vrsqrt.pop %v68
    %v71 = vrsqrt.pop %v69
    %v72 = vmul.f32 %v56, %v70
    %v73 = vmul.f32 %v57, %v71
    %v74 = vadd.f32 %v42, 1.0
    %v75 = vadd.f32 %v43, 1.0
    %v78 = vlaneseq
    %v79 = vshrl.u32 %v78, 7
    %v80 = vsub.s32 0, %v79
    %v81 = vrot.slane %v74, %v80
    %v82 = vlaneseq
    %v83 = vshrl.u32 %v82, 7
    %v84 = vsub.s32 0, %v83
    %v85 = vrot.slane %v75, %v84
    %86 = vrot.lane.b32.xlu0 %v81, 96
    %v87 = vpop.permute.xlu0 %86
    %88 = vrot.lane.b32.xlu0 %v85, 96
    %v89 = vpop.permute.xlu0 %88
    %v92 = vmul.f32 %v72, %v87
    %v93 = vmul.f32 %v73, %v89
    %v96 = vlaneseq
    %v97 = vshrl.u32 %v96, 7
    %v98 = vsub.s32 0, %v97
    %v99 = vrot.slane %v42, %v98
    %v100 = vlaneseq
    %v101 = vshrl.u32 %v100, 7
    %v102 = vsub.s32 0, %v101
    %v103 = vrot.slane %v43, %v102
    %v106 = vadd.f32 %v92, %v99
    %v107 = vadd.f32 %v93, %v103
    %v108 = vpack.c.bf16 %v107, %v106
    %v109 = vld [vmem:[%s3] sm:$0xf]
    %v110 = vld [vmem:[%s3 + $0x4] sm:$0xf]
    %v111 = vld [vmem:[%s3 + $0x8] sm:$0xf]
    %v112 = vld [vmem:[%s3 + $0xc] sm:$0xf]
    %v113 = vld [vmem:[%s4] sm:$0x1]
    %v115 = vlaneseq
    %v116 = vshrl.u32 %v115, 7
    %v117 = vsub.s32 0, %v116
    %v118 = vrot.slane %v113, %v117
    %v124 = vunpack.c.l.b16 %v109
    %v125 = vunpack.c.l.b16 %v110
    %v126 = vunpack.c.l.b16 %v111
    %v127 = vunpack.c.l.b16 %v112
    %v128 = vpack.c.b16 %v125, %v124
    %v129 = vpack.c.b16 %v127, %v126
    %v133 = vsel %vm46, %v108, 0
    %135 = vmatprep.subr.bf16.mxu0 0
    %136 = vmatpush1.bf16.msra.mxu0 %v128
    %137 = vmatprep.subr.bf16.mxu0 0
    %138 = vmatpush1.bf16.msra.mxu0 %v129
    %139 = vmatprep.subr.bf16.mxu0 0
    %140 = vmatpush1.bf16.msra.mxu0 0
    %141 = vmatprep.subr.bf16.mxu0 0
    %142 = vmatpush1.bf16.msra.mxu0 0
    %143 = vmatprep.subr.bf16.mxu0 0
    %144 = vmatpush1.bf16.msra.mxu0 0
    %145 = vmatprep.subr.bf16.mxu0 0
    %146 = vmatpush1.bf16.msra.mxu0 0
    %147 = vmatprep.subr.bf16.mxu0 0
    %148 = vmatpush1.bf16.msra.mxu0 0
    %149 = vmatprep.subr.bf16.mxu0 0
    %150 = vmatpush1.bf16.msra.mxu0 0
    %151 = vmatprep.subr.bf16.mxu0 0
    %152 = vmatpush1.bf16.msra.mxu0 0
    %153 = vmatprep.subr.bf16.mxu0 0
    %154 = vmatpush1.bf16.msra.mxu0 0
    %155 = vmatprep.subr.bf16.mxu0 0
    %156 = vmatpush1.bf16.msra.mxu0 0
    %157 = vmatprep.subr.bf16.mxu0 0
    %158 = vmatpush1.bf16.msra.mxu0 0
    %159 = vmatprep.subr.bf16.mxu0 0
    %160 = vmatpush1.bf16.msra.mxu0 0
    %161 = vmatprep.subr.bf16.mxu0 0
    %162 = vmatpush1.bf16.msra.mxu0 0
    %163 = vmatprep.subr.bf16.mxu0 0
    %164 = vmatpush1.bf16.msra.mxu0 0
    %165 = vmatprep.subr.bf16.mxu0 0
    %166 = vmatpush1.bf16.msra.mxu0 0
    %167 = vmatprep.mubr.bf16.mxu0 0
    %168 = vmatmul.mubr.bf16.gmra.mrb[0].mxu0 %v133
    %v169 = vpop.f32.mrb[0].mxu0
    %v170 = vadd.f32 %v118, %v169
    %v171 = vpop.f32.mrb[0].mxu0
    %v172 = vpop.f32.mrb[0].mxu0
    %v173 = vadd.f32 %v118, %v172
    %v174 = vpop.f32.mrb[0].mxu0
    %175 = vdwg.mxu0
    %v176 = vmul.f32 %v170, 0.35355338
    %v177 = vpack.c.bf16 %v176, %v176
    %vm178 = vcmask 60416
    %179 = vst.msk [vmem:[#allocation2] sm:$0xf] %vm178, %v177
    %v180 = vpack.c.bf16 %v170, %v170
    %v182 = vunpack.c.l.b16 %v180
    %v183 = vpack.c.b16 %v182, %v182
    %184 = vrot.lane.b32.xlu0 %v183, 96
    %v185 = vpop.permute.xlu0 %184
    %187 = vst.msk [vmem:[#allocation3] sm:$0xf] %vm178, %v185
    %188 = vrot.lane.b32.xlu0 %v183, 64
    %v189 = vpop.permute.xlu0 %188
    %191 = vst.msk [vmem:[#allocation4] sm:$0xf] %vm178, %v189
    %v193 = vunpack.c.l.b16 %v177
    %v194 = vpack.c.b16 %v193, %v193
    %195 = vrot.lane.b32.xlu0 %v194, 120
    %v196 = vpop.permute.xlu0 %195
    %s198 = scalar_lea.vmem [#allocation2], 4
    %199 = vst.msk [vmem:[%s198] sm:$0xf] %vm178, %v196
    %200 = vrot.lane.b32.xlu0 %v183, 88
    %v201 = vpop.permute.xlu0 %200
    %s203 = scalar_lea.vmem [#allocation3], 4
    %204 = vst.msk [vmem:[%s203] sm:$0xf] %vm178, %v201
    %205 = vrot.lane.b32.xlu0 %v183, 56
    %v206 = vpop.permute.xlu0 %205
    %s208 = scalar_lea.vmem [#allocation4], 4
    %209 = vst.msk [vmem:[%s208] sm:$0xf] %vm178, %v206
    %210 = vrot.lane.b32.xlu0 %v194, 112
    %v211 = vpop.permute.xlu0 %210
    %s213 = scalar_lea.vmem [#allocation2], 8
    %214 = vst.msk [vmem:[%s213] sm:$0xf] %vm178, %v211
    %215 = vrot.lane.b32.xlu0 %v183, 80
    %v216 = vpop.permute.xlu0 %215
    %s218 = scalar_lea.vmem [#allocation3], 8
    %219 = vst.msk [vmem:[%s218] sm:$0xf] %vm178, %v216
    %220 = vrot.lane.b32.xlu0 %v183, 48
    %v221 = vpop.permute.xlu0 %220
    %s223 = scalar_lea.vmem [#allocation4], 8
    %224 = vst.msk [vmem:[%s223] sm:$0xf] %vm178, %v221
    %225 = vrot.lane.b32.xlu0 %v194, 104
    %v226 = vpop.permute.xlu0 %225
    %s228 = scalar_lea.vmem [#allocation2], 12
    %229 = vst.msk [vmem:[%s228] sm:$0xf] %vm178, %v226
    %230 = vrot.lane.b32.xlu0 %v183, 72
    %v231 = vpop.permute.xlu0 %230
    %s233 = scalar_lea.vmem [#allocation3], 12
    %234 = vst.msk [vmem:[%s233] sm:$0xf] %vm178, %v231
    %235 = vrot.lane.b32.xlu0 %v183, 40
    %v236 = vpop.permute.xlu0 %235
    %s238 = scalar_lea.vmem [#allocation4], 12
    %239 = vst.msk [vmem:[%s238] sm:$0xf] %vm178, %v236
    %v240 = vmul.f32 %v173, 0.35355338
    %v241 = vpack.c.bf16 %v240, %v240
    %s242 = scalar_lea.vmem [#allocation2], 16
    %243 = vst.msk [vmem:[%s242] sm:$0xf] %vm178, %v241
    %v244 = vpack.c.bf16 %v173, %v173
    %v246 = vunpack.c.l.b16 %v244
    %v247 = vpack.c.b16 %v246, %v246
    %248 = vrot.lane.b32.xlu0 %v247, 96
    %v249 = vpop.permute.xlu0 %248
    %s251 = scalar_lea.vmem [#allocation3], 16
    %252 = vst.msk [vmem:[%s251] sm:$0xf] %vm178, %v249
    %253 = vrot.lane.b32.xlu0 %v247, 64
    %v254 = vpop.permute.xlu0 %253
    %s256 = scalar_lea.vmem [#allocation4], 16
    %257 = vst.msk [vmem:[%s256] sm:$0xf] %vm178, %v254
    %v259 = vunpack.c.l.b16 %v241
    %v260 = vpack.c.b16 %v259, %v259
    %261 = vrot.lane.b32.xlu0 %v260, 120
    %v262 = vpop.permute.xlu0 %261
    %s264 = scalar_lea.vmem [#allocation2], 20
    %265 = vst.msk [vmem:[%s264] sm:$0xf] %vm178, %v262
    %266 = vrot.lane.b32.xlu0 %v247, 88
    %v267 = vpop.permute.xlu0 %266
    %s269 = scalar_lea.vmem [#allocation3], 20
    %270 = vst.msk [vmem:[%s269] sm:$0xf] %vm178, %v267
    %271 = vrot.lane.b32.xlu0 %v247, 56
    %v272 = vpop.permute.xlu0 %271
    %s274 = scalar_lea.vmem [#allocation4], 20
    %275 = vst.msk [vmem:[%s274] sm:$0xf] %vm178, %v272
    %276 = vrot.lane.b32.xlu0 %v260, 112
    %v277 = vpop.permute.xlu0 %276
    %s279 = scalar_lea.vmem [#allocation2], 24
    %280 = vst.msk [vmem:[%s279] sm:$0xf] %vm178, %v277
    %281 = vrot.lane.b32.xlu0 %v247, 80
    %v282 = vpop.permute.xlu0 %281
    %s284 = scalar_lea.vmem [#allocation3], 24
    %285 = vst.msk [vmem:[%s284] sm:$0xf] %vm178, %v282
    %286 = vrot.lane.b32.xlu0 %v247, 48
    %v287 = vpop.permute.xlu0 %286
    %s289 = scalar_lea.vmem [#allocation4], 24
    %290 = vst.msk [vmem:[%s289] sm:$0xf] %vm178, %v287
    %291 = vrot.lane.b32.xlu0 %v260, 104
    %v292 = vpop.permute.xlu0 %291
    %s294 = scalar_lea.vmem [#allocation2], 28
    %295 = vst.msk [vmem:[%s294] sm:$0xf] %vm178, %v292
    %296 = vrot.lane.b32.xlu0 %v247, 72
    %v297 = vpop.permute.xlu0 %296
    %s299 = scalar_lea.vmem [#allocation3], 28
    %300 = vst.msk [vmem:[%s299] sm:$0xf] %vm178, %v297
    %301 = vrot.lane.b32.xlu0 %v247, 40
    %v302 = vpop.permute.xlu0 %301
    %s304 = scalar_lea.vmem [#allocation4], 28
    %305 = vst.msk [vmem:[%s304] sm:$0xf] %vm178, %v302
    %v306 = vld [vmem:[#allocation2] sm:$0xf]
    %v307 = vld [vmem:[#allocation2 + $0x4] sm:$0xf]
    %v308 = vld [vmem:[#allocation2 + $0x8] sm:$0xf]
    %v309 = vld [vmem:[#allocation2 + $0xc] sm:$0xf]
    %v310 = vld [vmem:[#allocation2 + $0x10] sm:$0xf]
    %v311 = vld [vmem:[#allocation2 + $0x14] sm:$0xf]
    %v312 = vld [vmem:[#allocation2 + $0x18] sm:$0xf]
    %v313 = vld [vmem:[#allocation2 + $0x1c] sm:$0xf]
    %v314 = vld [vmem:[#allocation3] sm:$0xf]
    %v315 = vld [vmem:[#allocation3 + $0x4] sm:$0xf]
    %v316 = vld [vmem:[#allocation3 + $0x8] sm:$0xf]
    %v317 = vld [vmem:[#allocation3 + $0xc] sm:$0xf]
    %v318 = vld [vmem:[#allocation3 + $0x10] sm:$0xf]
    %v319 = vld [vmem:[#allocation3 + $0x14] sm:$0xf]
    %v320 = vld [vmem:[#allocation3 + $0x18] sm:$0xf]
    %v321 = vld [vmem:[#allocation3 + $0x1c] sm:$0xf]
    %vm322 = vcmask 64512
    %v324 = vsel %vm322, %v306, 0
    %v327 = vsel %vm322, %v314, 0
    %329 = vmatprep.subr.bf16.mxu0 0
    %330 = vmatpush1.bf16.xpose.msra.mxu0 %v327
    %331 = vmatprep.subr.bf16.mxu0 0
    %332 = vmatpush1.bf16.xpose.msra.mxu0 0
    %333 = vmatprep.subr.bf16.mxu0 0
    %334 = vmatpush1.bf16.xpose.msra.mxu0 0
    %335 = vmatprep.subr.bf16.mxu0 0
    %336 = vmatpush1.bf16.xpose.msra.mxu0 0
    %337 = vmatprep.subr.bf16.mxu0 0
    %338 = vmatpush1.bf16.xpose.msra.mxu0 0
    %339 = vmatprep.subr.bf16.mxu0 0
    %340 = vmatpush1.bf16.xpose.msra.mxu0 0
    %341 = vmatprep.subr.bf16.mxu0 0
    %342 = vmatpush1.bf16.xpose.msra.mxu0 0
    %343 = vmatprep.subr.bf16.mxu0 0
    %344 = vmatpush1.bf16.xpose.msra.mxu0 0
    %345 = vmatprep.subr.bf16.mxu0 0
    %346 = vmatpush1.bf16.xpose.msra.mxu0 0
    %347 = vmatprep.subr.bf16.mxu0 0
    %348 = vmatpush1.bf16.xpose.msra.mxu0 0
    %349 = vmatprep.subr.bf16.mxu0 0
    %350 = vmatpush1.bf16.xpose.msra.mxu0 0
    %351 = vmatprep.subr.bf16.mxu0 0
    %352 = vmatpush1.bf16.xpose.msra.mxu0 0
    %353 = vmatprep.subr.bf16.mxu0 0
    %354 = vmatpush1.bf16.xpose.msra.mxu0 0
    %355 = vmatprep.subr.bf16.mxu0 0
    %356 = vmatpush1.bf16.xpose.msra.mxu0 0
    %357 = vmatprep.subr.bf16.mxu0 0
    %358 = vmatpush1.bf16.xpose.msra.mxu0 0
    %359 = vmatprep.subr.bf16.mxu0 0
    %360 = vmatpush1.bf16.xpose.msra.mxu0 0
    %361 = vmatprep.mubr.bf16.mxu0 0
    %362 = vmatmul.mubr.bf16.gmra.mrb[0].mxu0 %v324
    %v363 = vpop.f32.mrb[0].mxu0
    %v364 = vadd.f32 0.0, %v363
    %v365 = vpop.f32.mrb[0].mxu0
    %v366 = vpop.f32.mrb[0].mxu0
    %v367 = vpop.f32.mrb[0].mxu0
    %368 = vdwg.mxu0
    %v370 = vsel %vm322, %v307, 0
    %v373 = vsel %vm322, %v315, 0
    %375 = vmatprep.subr.bf16.mxu0 0
    %376 = vmatpush1.bf16.xpose.msra.mxu0 %v373
    %377 = vmatprep.subr.bf16.mxu0 0
    %378 = vmatpush1.bf16.xpose.msra.mxu0 0
    %379 = vmatprep.subr.bf16.mxu0 0
    %380 = vmatpush1.bf16.xpose.msra.mxu0 0
    %381 = vmatprep.subr.bf16.mxu0 0
    %382 = vmatpush1.bf16.xpose.msra.mxu0 0
    %383 = vmatprep.subr.bf16.mxu0 0
    %384 = vmatpush1.bf16.xpose.msra.mxu0 0
    %385 = vmatprep.subr.bf16.mxu0 0
    %386 = vmatpush1.bf16.xpose.msra.mxu0 0
    %387 = vmatprep.subr.bf16.mxu0 0
    %388 = vmatpush1.bf16.xpose.msra.mxu0 0
    %389 = vmatprep.subr.bf16.mxu0 0
    %390 = vmatpush1.bf16.xpose.msra.mxu0 0
    %391 = vmatprep.subr.bf16.mxu0 0
    %392 = vmatpush1.bf16.xpose.msra.mxu0 0
    %393 = vmatprep.subr.bf16.mxu0 0
    %394 = vmatpush1.bf16.xpose.msra.mxu0 0
    %395 = vmatprep.subr.bf16.mxu0 0
    %396 = vmatpush1.bf16.xpose.msra.mxu0 0
    %397 = vmatprep.subr.bf16.mxu0 0
    %398 = vmatpush1.bf16.xpose.msra.mxu0 0
    %399 = vmatprep.subr.bf16.mxu0 0
    %400 = vmatpush1.bf16.xpose.msra.mxu0 0
    %401 = vmatprep.subr.bf16.mxu0 0
    %402 = vmatpush1.bf16.xpose.msra.mxu0 0
    %403 = vmatprep.subr.bf16.mxu0 0
    %404 = vmatpush1.bf16.xpose.msra.mxu0 0
    %405 = vmatprep.subr.bf16.mxu0 0
    %406 = vmatpush1.bf16.xpose.msra.mxu0 0
    %407 = vmatprep.mubr.bf16.mxu0 0
    %408 = vmatmul.mubr.bf16.gmra.mrb[0].mxu0 %v370
    %v409 = vpop.f32.mrb[0].mxu0
    %v410 = vadd.f32 0.0, %v409
    %v411 = vpop.f32.mrb[0].mxu0
    %v412 = vpop.f32.mrb[0].mxu0
    %v413 = vpop.f32.mrb[0].mxu0
    %414 = vdwg.mxu0
    %v416 = vsel %vm322, %v308, 0
    %v419 = vsel %vm322, %v316, 0
    %421 = vmatprep.subr.bf16.mxu0 0
    %422 = vmatpush1.bf16.xpose.msra.mxu0 %v419
    %423 = vmatprep.subr.bf16.mxu0 0
    %424 = vmatpush1.bf16.xpose.msra.mxu0 0
    %425 = vmatprep.subr.bf16.mxu0 0
    %426 = vmatpush1.bf16.xpose.msra.mxu0 0
    %427 = vmatprep.subr.bf16.mxu0 0
    %428 = vmatpush1.bf16.xpose.msra.mxu0 0
    %429 = vmatprep.subr.bf16.mxu0 0
    %430 = vmatpush1.bf16.xpose.msra.mxu0 0
    %431 = vmatprep.subr.bf16.mxu0 0
    %432 = vmatpush1.bf16.xpose.msra.mxu0 0
    %433 = vmatprep.subr.bf16.mxu0 0
    %434 = vmatpush1.bf16.xpose.msra.mxu0 0
    %435 = vmatprep.subr.bf16.mxu0 0
    %436 = vmatpush1.bf16.xpose.msra.mxu0 0
    %437 = vmatprep.subr.bf16.mxu0 0
    %438 = vmatpush1.bf16.xpose.msra.mxu0 0
    %439 = vmatprep.subr.bf16.mxu0 0
    %440 = vmatpush1.bf16.xpose.msra.mxu0 0
    %441 = vmatprep.subr.bf16.mxu0 0
    %442 = vmatpush1.bf16.xpose.msra.mxu0 0
    %443 = vmatprep.subr.bf16.mxu0 0
    %444 = vmatpush1.bf16.xpose.msra.mxu0 0
    %445 = vmatprep.subr.bf16.mxu0 0
    %446 = vmatpush1.bf16.xpose.msra.mxu0 0
    %447 = vmatprep.subr.bf16.mxu0 0
    %448 = vmatpush1.bf16.xpose.msra.mxu0 0
    %449 = vmatprep.subr.bf16.mxu0 0
    %450 = vmatpush1.bf16.xpose.msra.mxu0 0
    %451 = vmatprep.subr.bf16.mxu0 0
    %452 = vmatpush1.bf16.xpose.msra.mxu0 0
    %453 = vmatprep.mubr.bf16.mxu0 0
    %454 = vmatmul.mubr.bf16.gmra.mrb[0].mxu0 %v416
    %v455 = vpop.f32.mrb[0].mxu0
    %v456 = vadd.f32 0.0, %v455
    %v457 = vpop.f32.mrb[0].mxu0
    %v458 = vpop.f32.mrb[0].mxu0
    %v459 = vpop.f32.mrb[0].mxu0
    %460 = vdwg.mxu0
    %v462 = vsel %vm322, %v309, 0
    %v465 = vsel %vm322, %v317, 0
    %467 = vmatprep.subr.bf16.mxu0 0
    %468 = vmatpush1.bf16.xpose.msra.mxu0 %v465
    %469 = vmatprep.subr.bf16.mxu0 0
    %470 = vmatpush1.bf16.xpose.msra.mxu0 0
    %471 = vmatprep.subr.bf16.mxu0 0
    %472 = vmatpush1.bf16.xpose.msra.mxu0 0
    %473 = vmatprep.subr.bf16.mxu0 0
    %474 = vmatpush1.bf16.xpose.msra.mxu0 0
    %475 = vmatprep.subr.bf16.mxu0 0
    %476 = vmatpush1.bf16.xpose.msra.mxu0 0
    %477 = vmatprep.subr.bf16.mxu0 0
    %478 = vmatpush1.bf16.xpose.msra.mxu0 0
    %479 = vmatprep.subr.bf16.mxu0 0
    %480 = vmatpush1.bf16.xpose.msra.mxu0 0
    %481 = vmatprep.subr.bf16.mxu0 0
    %482 = vmatpush1.bf16.xpose.msra.mxu0 0
    %483 = vmatprep.subr.bf16.mxu0 0
    %484 = vmatpush1.bf16.xpose.msra.mxu0 0
    %485 = vmatprep.subr.bf16.mxu0 0
    %486 = vmatpush1.bf16.xpose.msra.mxu0 0
    %487 = vmatprep.subr.bf16.mxu0 0
    %488 = vmatpush1.bf16.xpose.msra.mxu0 0
    %489 = vmatprep.subr.bf16.mxu0 0
    %490 = vmatpush1.bf16.xpose.msra.mxu0 0
    %491 = vmatprep.subr.bf16.mxu0 0
    %492 = vmatpush1.bf16.xpose.msra.mxu0 0
    %493 = vmatprep.subr.bf16.mxu0 0
    %494 = vmatpush1.bf16.xpose.msra.mxu0 0
    %495 = vmatprep.subr.bf16.mxu0 0
    %496 = vmatpush1.bf16.xpose.msra.mxu0 0
    %497 = vmatprep.subr.bf16.mxu0 0
    %498 = vmatpush1.bf16.xpose.msra.mxu0 0
    %499 = vmatprep.mubr.bf16.mxu0 0
    %500 = vmatmul.mubr.bf16.gmra.mrb[0].mxu0 %v462
    %v501 = vpop.f32.mrb[0].mxu0
    %v502 = vadd.f32 0.0, %v501
    %v503 = vpop.f32.mrb[0].mxu0
    %v504 = vpop.f32.mrb[0].mxu0
    %v505 = vpop.f32.mrb[0].mxu0
    %506 = vdwg.mxu0
    %v508 = vsel %vm322, %v310, 0
    %v511 = vsel %vm322, %v318, 0
    %513 = vmatprep.subr.bf16.mxu0 0
    %514 = vmatpush1.bf16.xpose.msra.mxu0 %v511
    %515 = vmatprep.subr.bf16.mxu0 0
    %516 = vmatpush1.bf16.xpose.msra.mxu0 0
    %517 = vmatprep.subr.bf16.mxu0 0
    %518 = vmatpush1.bf16.xpose.msra.mxu0 0
    %519 = vmatprep.subr.bf16.mxu0 0
    %520 = vmatpush1.bf16.xpose.msra.mxu0 0
    %521 = vmatprep.subr.bf16.mxu0 0
    %522 = vmatpush1.bf16.xpose.msra.mxu0 0
    %523 = vmatprep.subr.bf16.mxu0 0
    %524 = vmatpush1.bf16.xpose.msra.mxu0 0
    %525 = vmatprep.subr.bf16.mxu0 0
    %526 = vmatpush1.bf16.xpose.msra.mxu0 0
    %527 = vmatprep.subr.bf16.mxu0 0
    %528 = vmatpush1.bf16.xpose.msra.mxu0 0
    %529 = vmatprep.subr.bf16.mxu0 0
    %530 = vmatpush1.bf16.xpose.msra.mxu0 0
    %531 = vmatprep.subr.bf16.mxu0 0
    %532 = vmatpush1.bf16.xpose.msra.mxu0 0
    %533 = vmatprep.subr.bf16.mxu0 0
    %534 = vmatpush1.bf16.xpose.msra.mxu0 0
    %535 = vmatprep.subr.bf16.mxu0 0
    %536 = vmatpush1.bf16.xpose.msra.mxu0 0
    %537 = vmatprep.subr.bf16.mxu0 0
    %538 = vmatpush1.bf16.xpose.msra.mxu0 0
    %539 = vmatprep.subr.bf16.mxu0 0
    %540 = vmatpush1.bf16.xpose.msra.mxu0 0
    %541 = vmatprep.subr.bf16.mxu0 0
    %542 = vmatpush1.bf16.xpose.msra.mxu0 0
    %543 = vmatprep.subr.bf16.mxu0 0
    %544 = vmatpush1.bf16.xpose.msra.mxu0 0
    %545 = vmatprep.mubr.bf16.mxu0 0
    %546 = vmatmul.mubr.bf16.gmra.mrb[0].mxu0 %v508
    %v547 = vpop.f32.mrb[0].mxu0
    %v548 = vadd.f32 0.0, %v547
    %v549 = vpop.f32.mrb[0].mxu0
    %v550 = vpop.f32.mrb[0].mxu0
    %v551 = vpop.f32.mrb[0].mxu0
    %552 = vdwg.mxu0
    %v554 = vsel %vm322, %v311, 0
    %v557 = vsel %vm322, %v319, 0
    %559 = vmatprep.subr.bf16.mxu0 0
    %560 = vmatpush1.bf16.xpose.msra.mxu0 %v557
    %561 = vmatprep.subr.bf16.mxu0 0
    %562 = vmatpush1.bf16.xpose.msra.mxu0 0
    %563 = vmatprep.subr.bf16.mxu0 0
    %564 = vmatpush1.bf16.xpose.msra.mxu0 0
    %565 = vmatprep.subr.bf16.mxu0 0
    %566 = vmatpush1.bf16.xpose.msra.mxu0 0
    %567 = vmatprep.subr.bf16.mxu0 0
    %568 = vmatpush1.bf16.xpose.msra.mxu0 0
    %569 = vmatprep.subr.bf16.mxu0 0
    %570 = vmatpush1.bf16.xpose.msra.mxu0 0
    %571 = vmatprep.subr.bf16.mxu0 0
    %572 = vmatpush1.bf16.xpose.msra.mxu0 0
    %573 = vmatprep.subr.bf16.mxu0 0
    %574 = vmatpush1.bf16.xpose.msra.mxu0 0
    %575 = vmatprep.subr.bf16.mxu0 0
    %576 = vmatpush1.bf16.xpose.msra.mxu0 0
    %577 = vmatprep.subr.bf16.mxu0 0
    %578 = vmatpush1.bf16.xpose.msra.mxu0 0
    %579 = vmatprep.subr.bf16.mxu0 0
    %580 = vmatpush1.bf16.xpose.msra.mxu0 0
    %581 = vmatprep.subr.bf16.mxu0 0
    %582 = vmatpush1.bf16.xpose.msra.mxu0 0
    %583 = vmatprep.subr.bf16.mxu0 0
    %584 = vmatpush1.bf16.xpose.msra.mxu0 0
    %585 = vmatprep.subr.bf16.mxu0 0
    %586 = vmatpush1.bf16.xpose.msra.mxu0 0
    %587 = vmatprep.subr.bf16.mxu0 0
    %588 = vmatpush1.bf16.xpose.msra.mxu0 0
    %589 = vmatprep.subr.bf16.mxu0 0
    %590 = vmatpush1.bf16.xpose.msra.mxu0 0
    %591 = vmatprep.mubr.bf16.mxu0 0
    %592 = vmatmul.mubr.bf16.gmra.mrb[0].mxu0 %v554
    %v593 = vpop.f32.mrb[0].mxu0
    %v594 = vadd.f32 0.0, %v593
    %v595 = vpop.f32.mrb[0].mxu0
    %v596 = vpop.f32.mrb[0].mxu0
    %v597 = vpop.f32.mrb[0].mxu0
    %598 = vdwg.mxu0
    %v600 = vsel %vm322, %v312, 0
    %v603 = vsel %vm322, %v320, 0
    %605 = vmatprep.subr.bf16.mxu0 0
    %606 = vmatpush1.bf16.xpose.msra.mxu0 %v603
    %607 = vmatprep.subr.bf16.mxu0 0
    %608 = vmatpush1.bf16.xpose.msra.mxu0 0
    %609 = vmatprep.subr.bf16.mxu0 0
    %610 = vmatpush1.bf16.xpose.msra.mxu0 0
    %611 = vmatprep.subr.bf16.mxu0 0
    %612 = vmatpush1.bf16.xpose.msra.mxu0 0
    %613 = vmatprep.subr.bf16.mxu0 0
    %614 = vmatpush1.bf16.xpose.msra.mxu0 0
    %615 = vmatprep.subr.bf16.mxu0 0
    %616 = vmatpush1.bf16.xpose.msra.mxu0 0
    %617 = vmatprep.subr.bf16.mxu0 0
    %618 = vmatpush1.bf16.xpose.msra.mxu0 0
    %619 = vmatprep.subr.bf16.mxu0 0
    %620 = vmatpush1.bf16.xpose.msra.mxu0 0
    %621 = vmatprep.subr.bf16.mxu0 0
    %622 = vmatpush1.bf16.xpose.msra.mxu0 0
    %623 = vmatprep.subr.bf16.mxu0 0
    %624 = vmatpush1.bf16.xpose.msra.mxu0 0
    %625 = vmatprep.subr.bf16.mxu0 0
    %626 = vmatpush1.bf16.xpose.msra.mxu0 0
    %627 = vmatprep.subr.bf16.mxu0 0
    %628 = vmatpush1.bf16.xpose.msra.mxu0 0
    %629 = vmatprep.subr.bf16.mxu0 0
    %630 = vmatpush1.bf16.xpose.msra.mxu0 0
    %631 = vmatprep.subr.bf16.mxu0 0
    %632 = vmatpush1.bf16.xpose.msra.mxu0 0
    %633 = vmatprep.subr.bf16.mxu0 0
    %634 = vmatpush1.bf16.xpose.msra.mxu0 0
    %635 = vmatprep.subr.bf16.mxu0 0
    %636 = vmatpush1.bf16.xpose.msra.mxu0 0
    %637 = vmatprep.mubr.bf16.mxu0 0
    %638 = vmatmul.mubr.bf16.gmra.mrb[0].mxu0 %v600
    %v639 = vpop.f32.mrb[0].mxu0
    %v640 = vadd.f32 0.0, %v639
    %v641 = vpop.f32.mrb[0].mxu0
    %v642 = vpop.f32.mrb[0].mxu0
    %v643 = vpop.f32.mrb[0].mxu0
    %644 = vdwg.mxu0
    %v646 = vsel %vm322, %v313, 0
    %v649 = vsel %vm322, %v321, 0
    %651 = vmatprep.subr.bf16.mxu0 0
    %652 = vmatpush1.bf16.xpose.msra.mxu0 %v649
    %653 = vmatprep.subr.bf16.mxu0 0
    %654 = vmatpush1.bf16.xpose.msra.mxu0 0
    %655 = vmatprep.subr.bf16.mxu0 0
    %656 = vmatpush1.bf16.xpose.msra.mxu0 0
    %657 = vmatprep.subr.bf16.mxu0 0
    %658 = vmatpush1.bf16.xpose.msra.mxu0 0
    %659 = vmatprep.subr.bf16.mxu0 0
    %660 = vmatpush1.bf16.xpose.msra.mxu0 0
    %661 = vmatprep.subr.bf16.mxu0 0
    %662 = vmatpush1.bf16.xpose.msra.mxu0 0
    %663 = vmatprep.subr.bf16.mxu0 0
    %664 = vmatpush1.bf16.xpose.msra.mxu0 0
    %665 = vmatprep.subr.bf16.mxu0 0
    %666 = vmatpush1.bf16.xpose.msra.mxu0 0
    %667 = vmatprep.subr.bf16.mxu0 0
    %668 = vmatpush1.bf16.xpose.msra.mxu0 0
    %669 = vmatprep.subr.bf16.mxu0 0
    %670 = vmatpush1.bf16.xpose.msra.mxu0 0
    %671 = vmatprep.subr.bf16.mxu0 0
    %672 = vmatpush1.bf16.xpose.msra.mxu0 0
    %673 = vmatprep.subr.bf16.mxu0 0
    %674 = vmatpush1.bf16.xpose.msra.mxu0 0
    %675 = vmatprep.subr.bf16.mxu0 0
    %676 = vmatpush1.bf16.xpose.msra.mxu0 0
    %677 = vmatprep.subr.bf16.mxu0 0
    %678 = vmatpush1.bf16.xpose.msra.mxu0 0
    %679 = vmatprep.subr.bf16.mxu0 0
    %680 = vmatpush1.bf16.xpose.msra.mxu0 0
    %681 = vmatprep.subr.bf16.mxu0 0
    %682 = vmatpush1.bf16.xpose.msra.mxu0 0
    %683 = vmatprep.mubr.bf16.mxu0 0
    %684 = vmatmul.mubr.bf16.gmra.mrb[0].mxu0 %v646
    %v685 = vpop.f32.mrb[0].mxu0
    %v686 = vadd.f32 0.0, %v685
    %v687 = vpop.f32.mrb[0].mxu0
    %v688 = vpop.f32.mrb[0].mxu0
    %v689 = vpop.f32.mrb[0].mxu0
    %690 = vdwg.mxu0
    %v691 = vsel %vm322, %v364, -inf
    %692 = vmax.xlane.f32.xlu0 %v691
    %v693 = vpop.xlane.xlu0 %692
    %v694 = vsel %vm322, %v410, -inf
    %695 = vmax.xlane.f32.xlu0 %v694
    %v696 = vpop.xlane.xlu0 %695
    %v697 = vsel %vm322, %v456, -inf
    %698 = vmax.xlane.f32.xlu0 %v697
    %v699 = vpop.xlane.xlu0 %698
    %v700 = vsel %vm322, %v502, -inf
    %701 = vmax.xlane.f32.xlu0 %v700
    %v702 = vpop.xlane.xlu0 %701
    %v703 = vsel %vm322, %v548, -inf
    %704 = vmax.xlane.f32.xlu0 %v703
    %v705 = vpop.xlane.xlu0 %704
    %v706 = vsel %vm322, %v594, -inf
    %707 = vmax.xlane.f32.xlu0 %v706
    %v708 = vpop.xlane.xlu0 %707
    %v709 = vsel %vm322, %v640, -inf
    %710 = vmax.xlane.f32.xlu0 %v709
    %v711 = vpop.xlane.xlu0 %710
    %v712 = vsel %vm322, %v686, -inf
    %713 = vmax.xlane.f32.xlu0 %v712
    %v714 = vpop.xlane.xlu0 %713
    %v715 = vsub.f32 %v364, %v693
    %v716 = vsub.f32 %v410, %v696
    %v717 = vsub.f32 %v456, %v699
    %v718 = vsub.f32 %v502, %v702
    %v719 = vsub.f32 %v548, %v705
    %v720 = vsub.f32 %v594, %v708
    %v721 = vsub.f32 %v640, %v711
    %v722 = vsub.f32 %v686, %v714
    %v723 = vmul.f32 %v715, 1.442695
    %v724 = vpow.pop %v723
    %v725 = vmul.f32 %v716, 1.442695
    %v726 = vpow.pop %v725
    %v727 = vmul.f32 %v717, 1.442695
    %v728 = vpow.pop %v727
    %v729 = vmul.f32 %v718, 1.442695
    %v730 = vpow.pop %v729
    %v731 = vmul.f32 %v719, 1.442695
    %v732 = vpow.pop %v731
    %v733 = vmul.f32 %v720, 1.442695
    %v734 = vpow.pop %v733
    %v735 = vmul.f32 %v721, 1.442695
    %v736 = vpow.pop %v735
    %v737 = vmul.f32 %v722, 1.442695
    %v738 = vpow.pop %v737
    %v739 = vsel %vm322, %v724, 0.0
    %740 = vadd.xlane.f32.xlu0 %v739
    %v741 = vpop.xlane.xlu0 %740
    %v742 = vsel %vm322, %v726, 0.0
    %743 = vadd.xlane.f32.xlu0 %v742
    %v744 = vpop.xlane.xlu0 %743
    %v745 = vsel %vm322, %v728, 0.0
    %746 = vadd.xlane.f32.xlu0 %v745
    %v747 = vpop.xlane.xlu0 %746
    %v748 = vsel %vm322, %v730, 0.0
    %749 = vadd.xlane.f32.xlu0 %v748
    %v750 = vpop.xlane.xlu0 %749
    %v751 = vsel %vm322, %v732, 0.0
    %752 = vadd.xlane.f32.xlu0 %v751
    %v753 = vpop.xlane.xlu0 %752
    %v754 = vsel %vm322, %v734, 0.0
    %755 = vadd.xlane.f32.xlu0 %v754
    %v756 = vpop.xlane.xlu0 %755
    %v757 = vsel %vm322, %v736, 0.0
    %758 = vadd.xlane.f32.xlu0 %v757
    %v759 = vpop.xlane.xlu0 %758
    %v760 = vsel %vm322, %v738, 0.0
    %761 = vadd.xlane.f32.xlu0 %v760
    %v762 = vpop.xlane.xlu0 %761
    %v763 = vrcp.pop %v741
    %v764 = vrcp.pop %v744
    %v765 = vrcp.pop %v747
    %v766 = vrcp.pop %v750
    %v767 = vrcp.pop %v753
    %v768 = vrcp.pop %v756
    %v769 = vrcp.pop %v759
    %v770 = vrcp.pop %v762
    %v771 = vmul.f32 %v724, %v763
    %v772 = vmul.f32 %v726, %v764
    %v773 = vmul.f32 %v728, %v765
    %v774 = vmul.f32 %v730, %v766
    %v775 = vmul.f32 %v732, %v767
    %v776 = vmul.f32 %v734, %v768
    %v777 = vmul.f32 %v736, %v769
    %v778 = vmul.f32 %v738, %v770
    %v779 = vpack.c.bf16 %v771, %v771
    %v780 = vpack.c.bf16 %v772, %v772
    %v781 = vpack.c.bf16 %v773, %v773
    %v782 = vpack.c.bf16 %v774, %v774
    %v783 = vpack.c.bf16 %v775, %v775
    %v784 = vpack.c.bf16 %v776, %v776
    %v785 = vpack.c.bf16 %v777, %v777
    %v786 = vpack.c.bf16 %v778, %v778
    %v787 = vld [vmem:[#allocation4] sm:$0xf]
    %v788 = vld [vmem:[#allocation4 + $0x4] sm:$0xf]
    %v789 = vld [vmem:[#allocation4 + $0x8] sm:$0xf]
    %v790 = vld [vmem:[#allocation4 + $0xc] sm:$0xf]
    %v791 = vld [vmem:[#allocation4 + $0x10] sm:$0xf]
    %v792 = vld [vmem:[#allocation4 + $0x14] sm:$0xf]
    %v793 = vld [vmem:[#allocation4 + $0x18] sm:$0xf]
    %v794 = vld [vmem:[#allocation4 + $0x1c] sm:$0xf]
    %v796 = vsel %vm322, %v779, 0
    %vm798 = vcmask 1043456
    %v800 = vsel %vm798, %v787, 0
    %802 = vmatprep.subr.bf16.mxu0 0
    %803 = vmatpush1.bf16.msra.mxu0 %v800
    %804 = vmatprep.subr.bf16.mxu0 0
    %805 = vmatpush1.bf16.msra.mxu0 0
    %806 = vmatprep.subr.bf16.mxu0 0
    %807 = vmatpush1.bf16.msra.mxu0 0
    %808 = vmatprep.subr.bf16.mxu0 0
    %809 = vmatpush1.bf16.msra.mxu0 0
    %810 = vmatprep.subr.bf16.mxu0 0
    %811 = vmatpush1.bf16.msra.mxu0 0
    %812 = vmatprep.subr.bf16.mxu0 0
    %813 = vmatpush1.bf16.msra.mxu0 0
    %814 = vmatprep.subr.bf16.mxu0 0
    %815 = vmatpush1.bf16.msra.mxu0 0
    %816 = vmatprep.subr.bf16.mxu0 0
    %817 = vmatpush1.bf16.msra.mxu0 0
    %818 = vmatprep.subr.bf16.mxu0 0
    %819 = vmatpush1.bf16.msra.mxu0 0
    %820 = vmatprep.subr.bf16.mxu0 0
    %821 = vmatpush1.bf16.msra.mxu0 0
    %822 = vmatprep.subr.bf16.mxu0 0
    %823 = vmatpush1.bf16.msra.mxu0 0
    %824 = vmatprep.subr.bf16.mxu0 0
    %825 = vmatpush1.bf16.msra.mxu0 0
    %826 = vmatprep.subr.bf16.mxu0 0
    %827 = vmatpush1.bf16.msra.mxu0 0
    %828 = vmatprep.subr.bf16.mxu0 0
    %829 = vmatpush1.bf16.msra.mxu0 0
    %830 = vmatprep.subr.bf16.mxu0 0
    %831 = vmatpush1.bf16.msra.mxu0 0
    %832 = vmatprep.subr.bf16.mxu0 0
    %833 = vmatpush1.bf16.msra.mxu0 0
    %834 = vmatprep.mubr.bf16.mxu0 0
    %835 = vmatmul.mubr.bf16.gmra.mrb[0].mxu0 %v796
    %v836 = vpop.f32.mrb[0].mxu0
    %v837 = vadd.f32 0.0, %v836
    %v838 = vpop.f32.mrb[0].mxu0
    %v839 = vpop.f32.mrb[0].mxu0
    %v840 = vpop.f32.mrb[0].mxu0
    %841 = vdwg.mxu0
    %v843 = vsel %vm322, %v780, 0
    %v846 = vsel %vm798, %v788, 0
    %848 = vmatprep.subr.bf16.mxu0 0
    %849 = vmatpush1.bf16.msra.mxu0 %v846
    %850 = vmatprep.subr.bf16.mxu0 0
    %851 = vmatpush1.bf16.msra.mxu0 0
    %852 = vmatprep.subr.bf16.mxu0 0
    %853 = vmatpush1.bf16.msra.mxu0 0
    %854 = vmatprep.subr.bf16.mxu0 0
    %855 = vmatpush1.bf16.msra.mxu0 0
    %856 = vmatprep.subr.bf16.mxu0 0
    %857 = vmatpush1.bf16.msra.mxu0 0
    %858 = vmatprep.subr.bf16.mxu0 0
    %859 = vmatpush1.bf16.msra.mxu0 0
    %860 = vmatprep.subr.bf16.mxu0 0
    %861 = vmatpush1.bf16.msra.mxu0 0
    %862 = vmatprep.subr.bf16.mxu0 0
    %863 = vmatpush1.bf16.msra.mxu0 0
    %864 = vmatprep.subr.bf16.mxu0 0
    %865 = vmatpush1.bf16.msra.mxu0 0
    %866 = vmatprep.subr.bf16.mxu0 0
    %867 = vmatpush1.bf16.msra.mxu0 0
    %868 = vmatprep.subr.bf16.mxu0 0
    %869 = vmatpush1.bf16.msra.mxu0 0
    %870 = vmatprep.subr.bf16.mxu0 0
    %871 = vmatpush1.bf16.msra.mxu0 0
    %872 = vmatprep.subr.bf16.mxu0 0
    %873 = vmatpush1.bf16.msra.mxu0 0
    %874 = vmatprep.subr.bf16.mxu0 0
    %875 = vmatpush1.bf16.msra.mxu0 0
    %876 = vmatprep.subr.bf16.mxu0 0
    %877 = vmatpush1.bf16.msra.mxu0 0
    %878 = vmatprep.subr.bf16.mxu0 0
    %879 = vmatpush1.bf16.msra.mxu0 0
    %880 = vmatprep.mubr.bf16.mxu0 0
    %881 = vmatmul.mubr.bf16.gmra.mrb[0].mxu0 %v843
    %v882 = vpop.f32.mrb[0].mxu0
    %v883 = vadd.f32 0.0, %v882
    %v884 = vpop.f32.mrb[0].mxu0
    %v885 = vpop.f32.mrb[0].mxu0
    %v886 = vpop.f32.mrb[0].mxu0
    %887 = vdwg.mxu0
    %v889 = vsel %vm322, %v781, 0
    %v892 = vsel %vm798, %v789, 0
    %894 = vmatprep.subr.bf16.mxu0 0
    %895 = vmatpush1.bf16.msra.mxu0 %v892
    %896 = vmatprep.subr.bf16.mxu0 0
    %897 = vmatpush1.bf16.msra.mxu0 0
    %898 = vmatprep.subr.bf16.mxu0 0
    %899 = vmatpush1.bf16.msra.mxu0 0
    %900 = vmatprep.subr.bf16.mxu0 0
    %901 = vmatpush1.bf16.msra.mxu0 0
    %902 = vmatprep.subr.bf16.mxu0 0
    %903 = vmatpush1.bf16.msra.mxu0 0
    %904 = vmatprep.subr.bf16.mxu0 0
    %905 = vmatpush1.bf16.msra.mxu0 0
    %906 = vmatprep.subr.bf16.mxu0 0
    %907 = vmatpush1.bf16.msra.mxu0 0
    %908 = vmatprep.subr.bf16.mxu0 0
    %909 = vmatpush1.bf16.msra.mxu0 0
    %910 = vmatprep.subr.bf16.mxu0 0
    %911 = vmatpush1.bf16.msra.mxu0 0
    %912 = vmatprep.subr.bf16.mxu0 0
    %913 = vmatpush1.bf16.msra.mxu0 0
    %914 = vmatprep.subr.bf16.mxu0 0
    %915 = vmatpush1.bf16.msra.mxu0 0
    %916 = vmatprep.subr.bf16.mxu0 0
    %917 = vmatpush1.bf16.msra.mxu0 0
    %918 = vmatprep.subr.bf16.mxu0 0
    %919 = vmatpush1.bf16.msra.mxu0 0
    %920 = vmatprep.subr.bf16.mxu0 0
    %921 = vmatpush1.bf16.msra.mxu0 0
    %922 = vmatprep.subr.bf16.mxu0 0
    %923 = vmatpush1.bf16.msra.mxu0 0
    %924 = vmatprep.subr.bf16.mxu0 0
    %925 = vmatpush1.bf16.msra.mxu0 0
    %926 = vmatprep.mubr.bf16.mxu0 0
    %927 = vmatmul.mubr.bf16.gmra.mrb[0].mxu0 %v889
    %v928 = vpop.f32.mrb[0].mxu0
    %v929 = vadd.f32 0.0, %v928
    %v930 = vpop.f32.mrb[0].mxu0
    %v931 = vpop.f32.mrb[0].mxu0
    %v932 = vpop.f32.mrb[0].mxu0
    %933 = vdwg.mxu0
    %v935 = vsel %vm322, %v782, 0
    %v938 = vsel %vm798, %v790, 0
    %940 = vmatprep.subr.bf16.mxu0 0
    %941 = vmatpush1.bf16.msra.mxu0 %v938
    %942 = vmatprep.subr.bf16.mxu0 0
    %943 = vmatpush1.bf16.msra.mxu0 0
    %944 = vmatprep.subr.bf16.mxu0 0
    %945 = vmatpush1.bf16.msra.mxu0 0
    %946 = vmatprep.subr.bf16.mxu0 0
    %947 = vmatpush1.bf16.msra.mxu0 0
    %948 = vmatprep.subr.bf16.mxu0 0
    %949 = vmatpush1.bf16.msra.mxu0 0
    %950 = vmatprep.subr.bf16.mxu0 0
    %951 = vmatpush1.bf16.msra.mxu0 0
    %952 = vmatprep.subr.bf16.mxu0 0
    %953 = vmatpush1.bf16.msra.mxu0 0
    %954 = vmatprep.subr.bf16.mxu0 0
    %955 = vmatpush1.bf16.msra.mxu0 0
    %956 = vmatprep.subr.bf16.mxu0 0
    %957 = vmatpush1.bf16.msra.mxu0 0
    %958 = vmatprep.subr.bf16.mxu0 0
    %959 = vmatpush1.bf16.msra.mxu0 0
    %960 = vmatprep.subr.bf16.mxu0 0
    %961 = vmatpush1.bf16.msra.mxu0 0
    %962 = vmatprep.subr.bf16.mxu0 0
    %963 = vmatpush1.bf16.msra.mxu0 0
    %964 = vmatprep.subr.bf16.mxu0 0
    %965 = vmatpush1.bf16.msra.mxu0 0
    %966 = vmatprep.subr.bf16.mxu0 0
    %967 = vmatpush1.bf16.msra.mxu0 0
    %968 = vmatprep.subr.bf16.mxu0 0
    %969 = vmatpush1.bf16.msra.mxu0 0
    %970 = vmatprep.subr.bf16.mxu0 0
    %971 = vmatpush1.bf16.msra.mxu0 0
    %972 = vmatprep.mubr.bf16.mxu0 0
    %973 = vmatmul.mubr.bf16.gmra.mrb[0].mxu0 %v935
    %v974 = vpop.f32.mrb[0].mxu0
    %v975 = vadd.f32 0.0, %v974
    %v976 = vpop.f32.mrb[0].mxu0
    %v977 = vpop.f32.mrb[0].mxu0
    %v978 = vpop.f32.mrb[0].mxu0
    %979 = vdwg.mxu0
    %v981 = vsel %vm322, %v783, 0
    %v984 = vsel %vm798, %v791, 0
    %986 = vmatprep.subr.bf16.mxu0 0
    %987 = vmatpush1.bf16.msra.mxu0 %v984
    %988 = vmatprep.subr.bf16.mxu0 0
    %989 = vmatpush1.bf16.msra.mxu0 0
    %990 = vmatprep.subr.bf16.mxu0 0
    %991 = vmatpush1.bf16.msra.mxu0 0
    %992 = vmatprep.subr.bf16.mxu0 0
    %993 = vmatpush1.bf16.msra.mxu0 0
    %994 = vmatprep.subr.bf16.mxu0 0
    %995 = vmatpush1.bf16.msra.mxu0 0
    %996 = vmatprep.subr.bf16.mxu0 0
    %997 = vmatpush1.bf16.msra.mxu0 0
    %998 = vmatprep.subr.bf16.mxu0 0
    %999 = vmatpush1.bf16.msra.mxu0 0
    %1000 = vmatprep.subr.bf16.mxu0 0
    %1001 = vmatpush1.bf16.msra.mxu0 0
    %1002 = vmatprep.subr.bf16.mxu0 0
    %1003 = vmatpush1.bf16.msra.mxu0 0
    %1004 = vmatprep.subr.bf16.mxu0 0
    %1005 = vmatpush1.bf16.msra.mxu0 0
    %1006 = vmatprep.subr.bf16.mxu0 0
    %1007 = vmatpush1.bf16.msra.mxu0 0
    %1008 = vmatprep.subr.bf16.mxu0 0
    %1009 = vmatpush1.bf16.msra.mxu0 0
    %1010 = vmatprep.subr.bf16.mxu0 0
    %1011 = vmatpush1.bf16.msra.mxu0 0
    %1012 = vmatprep.subr.bf16.mxu0 0
    %1013 = vmatpush1.bf16.msra.mxu0 0
    %1014 = vmatprep.subr.bf16.mxu0 0
    %1015 = vmatpush1.bf16.msra.mxu0 0
    %1016 = vmatprep.subr.bf16.mxu0 0
    %1017 = vmatpush1.bf16.msra.mxu0 0
    %1018 = vmatprep.mubr.bf16.mxu0 0
    %1019 = vmatmul.mubr.bf16.gmra.mrb[0].mxu0 %v981
    %v1020 = vpop.f32.mrb[0].mxu0
    %v1021 = vadd.f32 0.0, %v1020
    %v1022 = vpop.f32.mrb[0].mxu0
    %v1023 = vpop.f32.mrb[0].mxu0
    %v1024 = vpop.f32.mrb[0].mxu0
    %1025 = vdwg.mxu0
    %v1027 = vsel %vm322, %v784, 0
    %v1030 = vsel %vm798, %v792, 0
    %1032 = vmatprep.subr.bf16.mxu0 0
    %1033 = vmatpush1.bf16.msra.mxu0 %v1030
    %1034 = vmatprep.subr.bf16.mxu0 0
    %1035 = vmatpush1.bf16.msra.mxu0 0
    %1036 = vmatprep.subr.bf16.mxu0 0
    %1037 = vmatpush1.bf16.msra.mxu0 0
    %1038 = vmatprep.subr.bf16.mxu0 0
    %1039 = vmatpush1.bf16.msra.mxu0 0
    %1040 = vmatprep.subr.bf16.mxu0 0
    %1041 = vmatpush1.bf16.msra.mxu0 0
    %1042 = vmatprep.subr.bf16.mxu0 0
    %1043 = vmatpush1.bf16.msra.mxu0 0
    %1044 = vmatprep.subr.bf16.mxu0 0
    %1045 = vmatpush1.bf16.msra.mxu0 0
    %1046 = vmatprep.subr.bf16.mxu0 0
    %1047 = vmatpush1.bf16.msra.mxu0 0
    %1048 = vmatprep.subr.bf16.mxu0 0
    %1049 = vmatpush1.bf16.msra.mxu0 0
    %1050 = vmatprep.subr.bf16.mxu0 0
    %1051 = vmatpush1.bf16.msra.mxu0 0
    %1052 = vmatprep.subr.bf16.mxu0 0
    %1053 = vmatpush1.bf16.msra.mxu0 0
    %1054 = vmatprep.subr.bf16.mxu0 0
    %1055 = vmatpush1.bf16.msra.mxu0 0
    %1056 = vmatprep.subr.bf16.mxu0 0
    %1057 = vmatpush1.bf16.msra.mxu0 0
    %1058 = vmatprep.subr.bf16.mxu0 0
    %1059 = vmatpush1.bf16.msra.mxu0 0
    %1060 = vmatprep.subr.bf16.mxu0 0
    %1061 = vmatpush1.bf16.msra.mxu0 0
    %1062 = vmatprep.subr.bf16.mxu0 0
    %1063 = vmatpush1.bf16.msra.mxu0 0
    %1064 = vmatprep.mubr.bf16.mxu0 0
    %1065 = vmatmul.mubr.bf16.gmra.mrb[0].mxu0 %v1027
    %v1066 = vpop.f32.mrb[0].mxu0
    %v1067 = vadd.f32 0.0, %v1066
    %v1068 = vpop.f32.mrb[0].mxu0
    %v1069 = vpop.f32.mrb[0].mxu0
    %v1070 = vpop.f32.mrb[0].mxu0
    %1071 = vdwg.mxu0
    %v1073 = vsel %vm322, %v785, 0
    %v1076 = vsel %vm798, %v793, 0
    %1078 = vmatprep.subr.bf16.mxu0 0
    %1079 = vmatpush1.bf16.msra.mxu0 %v1076
    %1080 = vmatprep.subr.bf16.mxu0 0
    %1081 = vmatpush1.bf16.msra.mxu0 0
    %1082 = vmatprep.subr.bf16.mxu0 0
    %1083 = vmatpush1.bf16.msra.mxu0 0
    %1084 = vmatprep.subr.bf16.mxu0 0
    %1085 = vmatpush1.bf16.msra.mxu0 0
    %1086 = vmatprep.subr.bf16.mxu0 0
    %1087 = vmatpush1.bf16.msra.mxu0 0
    %1088 = vmatprep.subr.bf16.mxu0 0
    %1089 = vmatpush1.bf16.msra.mxu0 0
    %1090 = vmatprep.subr.bf16.mxu0 0
    %1091 = vmatpush1.bf16.msra.mxu0 0
    %1092 = vmatprep.subr.bf16.mxu0 0
    %1093 = vmatpush1.bf16.msra.mxu0 0
    %1094 = vmatprep.subr.bf16.mxu0 0
    %1095 = vmatpush1.bf16.msra.mxu0 0
    %1096 = vmatprep.subr.bf16.mxu0 0
    %1097 = vmatpush1.bf16.msra.mxu0 0
    %1098 = vmatprep.subr.bf16.mxu0 0
    %1099 = vmatpush1.bf16.msra.mxu0 0
    %1100 = vmatprep.subr.bf16.mxu0 0
    %1101 = vmatpush1.bf16.msra.mxu0 0
    %1102 = vmatprep.subr.bf16.mxu0 0
    %1103 = vmatpush1.bf16.msra.mxu0 0
    %1104 = vmatprep.subr.bf16.mxu0 0
    %1105 = vmatpush1.bf16.msra.mxu0 0
    %1106 = vmatprep.subr.bf16.mxu0 0
    %1107 = vmatpush1.bf16.msra.mxu0 0
    %1108 = vmatprep.subr.bf16.mxu0 0
    %1109 = vmatpush1.bf16.msra.mxu0 0
    %1110 = vmatprep.mubr.bf16.mxu0 0
    %1111 = vmatmul.mubr.bf16.gmra.mrb[0].mxu0 %v1073
    %v1112 = vpop.f32.mrb[0].mxu0
    %v1113 = vadd.f32 0.0, %v1112
    %v1114 = vpop.f32.mrb[0].mxu0
    %v1115 = vpop.f32.mrb[0].mxu0
    %v1116 = vpop.f32.mrb[0].mxu0
    %1117 = vdwg.mxu0
    %v1119 = vsel %vm322, %v786, 0
    %v1122 = vsel %vm798, %v794, 0
    %1124 = vmatprep.subr.bf16.mxu0 0
    %1125 = vmatpush1.bf16.msra.mxu0 %v1122
    %1126 = vmatprep.subr.bf16.mxu0 0
    %1127 = vmatpush1.bf16.msra.mxu0 0
    %1128 = vmatprep.subr.bf16.mxu0 0
    %1129 = vmatpush1.bf16.msra.mxu0 0
    %1130 = vmatprep.subr.bf16.mxu0 0
    %1131 = vmatpush1.bf16.msra.mxu0 0
    %1132 = vmatprep.subr.bf16.mxu0 0
    %1133 = vmatpush1.bf16.msra.mxu0 0
    %1134 = vmatprep.subr.bf16.mxu0 0
    %1135 = vmatpush1.bf16.msra.mxu0 0
    %1136 = vmatprep.subr.bf16.mxu0 0
    %1137 = vmatpush1.bf16.msra.mxu0 0
    %1138 = vmatprep.subr.bf16.mxu0 0
    %1139 = vmatpush1.bf16.msra.mxu0 0
    %1140 = vmatprep.subr.bf16.mxu0 0
    %1141 = vmatpush1.bf16.msra.mxu0 0
    %1142 = vmatprep.subr.bf16.mxu0 0
    %1143 = vmatpush1.bf16.msra.mxu0 0
    %1144 = vmatprep.subr.bf16.mxu0 0
    %1145 = vmatpush1.bf16.msra.mxu0 0
    %1146 = vmatprep.subr.bf16.mxu0 0
    %1147 = vmatpush1.bf16.msra.mxu0 0
    %1148 = vmatprep.subr.bf16.mxu0 0
    %1149 = vmatpush1.bf16.msra.mxu0 0
    %1150 = vmatprep.subr.bf16.mxu0 0
    %1151 = vmatpush1.bf16.msra.mxu0 0
    %1152 = vmatprep.subr.bf16.mxu0 0
    %1153 = vmatpush1.bf16.msra.mxu0 0
    %1154 = vmatprep.subr.bf16.mxu0 0
    %1155 = vmatpush1.bf16.msra.mxu0 0
    %1156 = vmatprep.mubr.bf16.mxu0 0
    %1157 = vmatmul.mubr.bf16.gmra.mrb[0].mxu0 %v1119
    %v1158 = vpop.f32.mrb[0].mxu0
    %v1159 = vadd.f32 0.0, %v1158
    %v1160 = vpop.f32.mrb[0].mxu0
    %v1161 = vpop.f32.mrb[0].mxu0
    %v1162 = vpop.f32.mrb[0].mxu0
    %1163 = vdwg.mxu0
    %v1164 = vpack.c.bf16 %v837, %v837
    %1165 = vst.msk [vmem:[#allocation5] sm:$0xf] %vm178, %v1164
    %v1166 = vpack.c.bf16 %v883, %v883
    %1168 = vrot.lane.b32.xlu0 %v1166, 8
    %v1169 = vpop.permute.xlu0 %1168
    %vm1171 = vcmask 126016
    %1172 = vst.msk [vmem:[#allocation5] sm:$0xf] %vm1171, %v1169
    %v1173 = vpack.c.bf16 %v929, %v929
    %1175 = vrot.lane.b32.xlu0 %v1173, 16
    %v1176 = vpop.permute.xlu0 %1175
    %vm1178 = vcmask 191616
    %1179 = vst.msk [vmem:[#allocation5] sm:$0xf] %vm1178, %v1176
    %v1180 = vpack.c.bf16 %v975, %v975
    %1182 = vrot.lane.b32.xlu0 %v1180, 24
    %v1183 = vpop.permute.xlu0 %1182
    %vm1185 = vcmask 257216
    %1186 = vst.msk [vmem:[#allocation5] sm:$0xf] %vm1185, %v1183
    %v1187 = vpack.c.bf16 %v1021, %v1021
    %v1189 = vrot.slane %v1187, 4
    %vm1191 = vcmask 64516
    %1192 = vst.msk [vmem:[#allocation5] sm:$0xf0] %vm1191, %v1189
    %v1193 = vpack.c.bf16 %v1067, %v1067
    %v1195 = vrot.slane %v1193, 4
    %1196 = vrot.lane.b32.xlu0 %v1195, 8
    %v1197 = vpop.permute.xlu0 %1196
    %vm1199 = vcmask 130116
    %1200 = vst.msk [vmem:[#allocation5] sm:$0xf0] %vm1199, %v1197
    %v1201 = vpack.c.bf16 %v1113, %v1113
    %v1203 = vrot.slane %v1201, 4
    %1204 = vrot.lane.b32.xlu0 %v1203, 16
    %v1205 = vpop.permute.xlu0 %1204
    %vm1207 = vcmask 195716
    %1208 = vst.msk [vmem:[#allocation5] sm:$0xf0] %vm1207, %v1205
    %v1209 = vpack.c.bf16 %v1159, %v1159
    %v1211 = vrot.slane %v1209, 4
    %1212 = vrot.lane.b32.xlu0 %v1211, 24
    %v1213 = vpop.permute.xlu0 %1212
    %vm1215 = vcmask 261316
    %1216 = vst.msk [vmem:[#allocation5] sm:$0xf0] %vm1215, %v1213
    %v1217 = vld [vmem:[#allocation5] sm:$0xff]
    %v1218 = vld [vmem:[%s5] sm:$0xf]
    %v1219 = vld [vmem:[%s5 + $0x4] sm:$0xf]
    %v1220 = vld [vmem:[%s5 + $0x8] sm:$0xf]
    %v1221 = vld [vmem:[%s5 + $0xc] sm:$0xf]
    %v1222 = vld [vmem:[%s6] sm:$0x1]
    %v1224 = vlaneseq
    %v1225 = vshrl.u32 %v1224, 7
    %v1226 = vsub.s32 0, %v1225
    %v1227 = vrot.slane %v1222, %v1226
    %v1233 = vunpack.c.l.b16 %v1218
    %v1234 = vunpack.c.l.b16 %v1219
    %v1235 = vunpack.c.l.b16 %v1220
    %v1236 = vunpack.c.l.b16 %v1221
    %v1237 = vpack.c.b16 %v1234, %v1233
    %v1238 = vpack.c.b16 %v1236, %v1235
    %v1242 = vsel %vm46, %v1217, 0
    %1244 = vmatprep.subr.bf16.mxu0 0
    %1245 = vmatpush1.bf16.msra.mxu0 %v1237
    %1246 = vmatprep.subr.bf16.mxu0 0
    %1247 = vmatpush1.bf16.msra.mxu0 %v1238
    %1248 = vmatprep.subr.bf16.mxu0 0
    %1249 = vmatpush1.bf16.msra.mxu0 0
    %1250 = vmatprep.subr.bf16.mxu0 0
    %1251 = vmatpush1.bf16.msra.mxu0 0
    %1252 = vmatprep.subr.bf16.mxu0 0
    %1253 = vmatpush1.bf16.msra.mxu0 0
    %1254 = vmatprep.subr.bf16.mxu0 0
    %1255 = vmatpush1.bf16.msra.mxu0 0
    %1256 = vmatprep.subr.bf16.mxu0 0
    %1257 = vmatpush1.bf16.msra.mxu0 0
    %1258 = vmatprep.subr.bf16.mxu0 0
    %1259 = vmatpush1.bf16.msra.mxu0 0
    %1260 = vmatprep.subr.bf16.mxu0 0
    %1261 = vmatpush1.bf16.msra.mxu0 0
    %1262 = vmatprep.subr.bf16.mxu0 0
    %1263 = vmatpush1.bf16.msra.mxu0 0
    %1264 = vmatprep.subr.bf16.mxu0 0
    %1265 = vmatpush1.bf16.msra.mxu0 0
    %1266 = vmatprep.subr.bf16.mxu0 0
    %1267 = vmatpush1.bf16.msra.mxu0 0
    %1268 = vmatprep.subr.bf16.mxu0 0
    %1269 = vmatpush1.bf16.msra.mxu0 0
    %1270 = vmatprep.subr.bf16.mxu0 0
    %1271 = vmatpush1.bf16.msra.mxu0 0
    %1272 = vmatprep.subr.bf16.mxu0 0
    %1273 = vmatpush1.bf16.msra.mxu0 0
    %1274 = vmatprep.subr.bf16.mxu0 0
    %1275 = vmatpush1.bf16.msra.mxu0 0
    %1276 = vmatprep.mubr.bf16.mxu0 0
    %1277 = vmatmul.mubr.bf16.gmra.mrb[0].mxu0 %v1242
    %v1278 = vpop.f32.mrb[0].mxu0
    %v1279 = vadd.f32 %v1227, %v1278
    %v1280 = vpop.f32.mrb[0].mxu0
    %v1281 = vpop.f32.mrb[0].mxu0
    %v1282 = vadd.f32 %v1227, %v1281
    %v1283 = vpop.f32.mrb[0].mxu0
    %1284 = vdwg.mxu0
    %1287 = vrot.lane.b32.xlu0 %v1279, 64
    %v1288 = vpop.permute.xlu0 %1287
    %1289 = vrot.lane.b32.xlu0 %v1282, 64
    %v1290 = vpop.permute.xlu0 %1289
    %v1293 = vmul.f32 %v99, %v1288
    %v1294 = vmul.f32 %v103, %v1290
    %1297 = vrot.lane.b32.xlu0 %v1293, 64
    %v1298 = vpop.permute.xlu0 %1297
    %1299 = vrot.lane.b32.xlu0 %v1294, 64
    %v1300 = vpop.permute.xlu0 %1299
    %v1303 = vadd.f32 %v40, %v1298
    %v1304 = vadd.f32 %v41, %v1300
    %v1305 = vsel %vm46, %v1303, 0.0
    %1306 = vadd.xlane.f32.xlu0 %v1305
    %v1307 = vpop.xlane.xlu0 %1306
    %v1308 = vsel %vm46, %v1304, 0.0
    %1309 = vadd.xlane.f32.xlu0 %v1308
    %v1310 = vpop.xlane.xlu0 %1309
    %v1311 = vmul.f32 %v1307, %v53
    %v1312 = vmul.f32 %v1310, %v53
    %v1313 = vsub.f32 %v1303, %v1311
    %v1314 = vsub.f32 %v1304, %v1312
    %v1315 = vmul.f32 %v1313, %v1313
    %v1316 = vmul.f32 %v1314, %v1314
    %v1317 = vsel %vm46, %v1315, 0.0
    %1318 = vadd.xlane.f32.xlu0 %v1317
    %v1319 = vpop.xlane.xlu0 %1318
    %v1320 = vsel %vm46, %v1316, 0.0
    %1321 = vadd.xlane.f32.xlu0 %v1320
    %v1322 = vpop.xlane.xlu0 %1321
    %v1323 = vmul.f32 %v1319, %v53
    %v1324 = vmul.f32 %v1322, %v53
    %v1325 = vadd.f32 %v1323, 1e-06
    %v1326 = vadd.f32 %v1324, 1e-06
    %v1327 = vrsqrt.pop %v1325
    %v1328 = vrsqrt.pop %v1326
    %v1329 = vmul.f32 %v1313, %v1327
    %v1330 = vmul.f32 %v1314, %v1328
    %v1331 = vadd.f32 %v44, 1.0
    %v1332 = vadd.f32 %v45, 1.0
    %v1335 = vlaneseq
    %v1336 = vshrl.u32 %v1335, 7
    %v1337 = vsub.s32 0, %v1336
    %v1338 = vrot.slane %v1331, %v1337
    %v1339 = vlaneseq
    %v1340 = vshrl.u32 %v1339, 7
    %v1341 = vsub.s32 0, %v1340
    %v1342 = vrot.slane %v1332, %v1341
    %1343 = vrot.lane.b32.xlu0 %v1338, 96
    %v1344 = vpop.permute.xlu0 %1343
    %1345 = vrot.lane.b32.xlu0 %v1342, 96
    %v1346 = vpop.permute.xlu0 %1345
    %v1349 = vmul.f32 %v1329, %v1344
    %v1350 = vmul.f32 %v1330, %v1346
    %v1353 = vlaneseq
    %v1354 = vshrl.u32 %v1353, 7
    %v1355 = vsub.s32 0, %v1354
    %v1356 = vrot.slane %v44, %v1355
    %v1357 = vlaneseq
    %v1358 = vshrl.u32 %v1357, 7
    %v1359 = vsub.s32 0, %v1358
    %v1360 = vrot.slane %v45, %v1359
    %v1363 = vadd.f32 %v1349, %v1356
    %v1364 = vadd.f32 %v1350, %v1360
    %v1365 = vpack.c.bf16 %v1364, %v1363
    %v1366 = vld [vmem:[%s7] sm:$0xf]
    %v1367 = vld [vmem:[%s7 + $0x4] sm:$0xf]
    %v1368 = vld [vmem:[%s7 + $0x8] sm:$0xf]
    %v1369 = vld [vmem:[%s7 + $0xc] sm:$0xf]
    %v1370 = vld [vmem:[%s8] sm:$0x1]
    %v1372 = vlaneseq
    %v1373 = vshrl.u32 %v1372, 7
    %v1374 = vsub.s32 0, %v1373
    %v1375 = vrot.slane %v1370, %v1374
    %v1381 = vunpack.c.l.b16 %v1366
    %v1382 = vunpack.c.l.b16 %v1367
    %v1383 = vunpack.c.l.b16 %v1368
    %v1384 = vunpack.c.l.b16 %v1369
    %v1385 = vpack.c.b16 %v1382, %v1381
    %v1386 = vpack.c.b16 %v1384, %v1383
    %v1390 = vsel %vm46, %v1365, 0
    %1392 = vmatprep.subr.bf16.mxu0 0
    %1393 = vmatpush1.bf16.msra.mxu0 %v1385
    %1394 = vmatprep.subr.bf16.mxu0 0
    %1395 = vmatpush1.bf16.msra.mxu0 %v1386
    %1396 = vmatprep.subr.bf16.mxu0 0
    %1397 = vmatpush1.bf16.msra.mxu0 0
    %1398 = vmatprep.subr.bf16.mxu0 0
    %1399 = vmatpush1.bf16.msra.mxu0 0
    %1400 = vmatprep.subr.bf16.mxu0 0
    %1401 = vmatpush1.bf16.msra.mxu0 0
    %1402 = vmatprep.subr.bf16.mxu0 0
    %1403 = vmatpush1.bf16.msra.mxu0 0
    %1404 = vmatprep.subr.bf16.mxu0 0
    %1405 = vmatpush1.bf16.msra.mxu0 0
    %1406 = vmatprep.subr.bf16.mxu0 0
    %1407 = vmatpush1.bf16.msra.mxu0 0
    %1408 = vmatprep.subr.bf16.mxu0 0
    %1409 = vmatpush1.bf16.msra.mxu0 0
    %1410 = vmatprep.subr.bf16.mxu0 0
    %1411 = vmatpush1.bf16.msra.mxu0 0
    %1412 = vmatprep.subr.bf16.mxu0 0
    %1413 = vmatpush1.bf16.msra.mxu0 0
    %1414 = vmatprep.subr.bf16.mxu0 0
    %1415 = vmatpush1.bf16.msra.mxu0 0
    %1416 = vmatprep.subr.bf16.mxu0 0
    %1417 = vmatpush1.bf16.msra.mxu0 0
    %1418 = vmatprep.subr.bf16.mxu0 0
    %1419 = vmatpush1.bf16.msra.mxu0 0
    %1420 = vmatprep.subr.bf16.mxu0 0
    %1421 = vmatpush1.bf16.msra.mxu0 0
    %1422 = vmatprep.subr.bf16.mxu0 0
    %1423 = vmatpush1.bf16.msra.mxu0 0
    %1424 = vmatprep.mubr.bf16.mxu0 0
    %1425 = vmatmul.mubr.bf16.gmra.mrb[0].mxu0 %v1390
    %v1426 = vpop.f32.mrb[0].mxu0
    %v1427 = vadd.f32 %v1375, %v1426
    %v1428 = vpop.f32.mrb[0].mxu0
    %v1429 = vpop.f32.mrb[0].mxu0
    %v1430 = vadd.f32 %v1375, %v1429
    %v1431 = vpop.f32.mrb[0].mxu0
    %1432 = vdwg.mxu0
    %v1433 = vmul.f32 %v1427, 0.5
    %v1434 = vmul.f32 %v1430, 0.5
    %v1435 = vmul.f32 %v1427, 0.044715
    %v1436 = vmul.f32 %v1430, 0.044715
    %v1437 = vmul.f32 %v1435, %v1427
    %v1438 = vmul.f32 %v1436, %v1430
    %v1439 = vmul.f32 %v1437, %v1427
    %v1440 = vmul.f32 %v1438, %v1430
    %v1441 = vadd.f32 %v1427, %v1439
    %v1442 = vadd.f32 %v1430, %v1440
    %v1443 = vmul.f32 %v1441, 0.7978846
    %v1444 = vmul.f32 %v1442, 0.7978846
    %v1445 = vtanh.pop %v1443
    %v1446 = vtanh.pop %v1444
    %v1447 = vadd.f32 %v1445, 1.0
    %v1448 = vadd.f32 %v1446, 1.0
    %v1449 = vmul.f32 %v1433, %v1447
    %v1450 = vmul.f32 %v1434, %v1448
    %v1451 = vpack.c.bf16 %v1450, %v1449
    %v1452 = vld [vmem:[%s9] sm:$0xf]
    %v1453 = vld [vmem:[%s9 + $0x4] sm:$0xf]
    %v1454 = vld [vmem:[%s9 + $0x8] sm:$0xf]
    %v1455 = vld [vmem:[%s9 + $0xc] sm:$0xf]
    %v1456 = vld [vmem:[%s9 + $0x10] sm:$0xf]
    %v1457 = vld [vmem:[%s9 + $0x14] sm:$0xf]
    %v1458 = vld [vmem:[%s9 + $0x18] sm:$0xf]
    %v1459 = vld [vmem:[%s9 + $0x1c] sm:$0xf]
    %v1460 = vld [vmem:[%s9 + $0x20] sm:$0xf]
    %v1461 = vld [vmem:[%s9 + $0x24] sm:$0xf]
    %v1462 = vld [vmem:[%s9 + $0x28] sm:$0xf]
    %v1463 = vld [vmem:[%s9 + $0x2c] sm:$0xf]
    %v1464 = vld [vmem:[%s9 + $0x30] sm:$0xf]
    %v1465 = vld [vmem:[%s9 + $0x34] sm:$0xf]
    %v1466 = vld [vmem:[%s9 + $0x38] sm:$0xf]
    %v1467 = vld [vmem:[%s9 + $0x3c] sm:$0xf]
    %v1468 = vld [vmem:[%s10] sm:$0x1]
    %v1470 = vlaneseq
    %v1471 = vshrl.u32 %v1470, 7
    %v1472 = vsub.s32 0, %v1471
    %v1473 = vrot.slane %v1468, %v1472
    %v1491 = vunpack.c.l.b16 %v1452
    %v1492 = vunpack.c.l.b16 %v1453
    %v1493 = vunpack.c.l.b16 %v1454
    %v1494 = vunpack.c.l.b16 %v1455
    %v1495 = vunpack.c.l.b16 %v1456
    %v1496 = vunpack.c.l.b16 %v1457
    %v1497 = vunpack.c.l.b16 %v1458
    %v1498 = vunpack.c.l.b16 %v1459
    %v1499 = vunpack.c.l.b16 %v1460
    %v1500 = vunpack.c.l.b16 %v1461
    %v1501 = vunpack.c.l.b16 %v1462
    %v1502 = vunpack.c.l.b16 %v1463
    %v1503 = vunpack.c.l.b16 %v1464
    %v1504 = vunpack.c.l.b16 %v1465
    %v1505 = vunpack.c.l.b16 %v1466
    %v1506 = vunpack.c.l.b16 %v1467
    %v1507 = vpack.c.b16 %v1492, %v1491
    %v1508 = vpack.c.b16 %v1494, %v1493
    %v1509 = vpack.c.b16 %v1496, %v1495
    %v1510 = vpack.c.b16 %v1498, %v1497
    %v1511 = vpack.c.b16 %v1500, %v1499
    %v1512 = vpack.c.b16 %v1502, %v1501
    %v1513 = vpack.c.b16 %v1504, %v1503
    %v1514 = vpack.c.b16 %v1506, %v1505
    %1523 = vmatprep.subr.bf16.mxu0 0
    %1524 = vmatpush1.bf16.msra.mxu0 %v1507
    %1525 = vmatprep.subr.bf16.mxu0 0
    %1526 = vmatpush1.bf16.msra.mxu0 %v1508
    %1527 = vmatprep.subr.bf16.mxu0 0
    %1528 = vmatpush1.bf16.msra.mxu0 %v1509
    %1529 = vmatprep.subr.bf16.mxu0 0
    %1530 = vmatpush1.bf16.msra.mxu0 %v1510
    %1531 = vmatprep.subr.bf16.mxu0 0
    %1532 = vmatpush1.bf16.msra.mxu0 %v1511
    %1533 = vmatprep.subr.bf16.mxu0 0
    %1534 = vmatpush1.bf16.msra.mxu0 %v1512
    %1535 = vmatprep.subr.bf16.mxu0 0
    %1536 = vmatpush1.bf16.msra.mxu0 %v1513
    %1537 = vmatprep.subr.bf16.mxu0 0
    %1538 = vmatpush1.bf16.msra.mxu0 %v1514
    %1539 = vmatprep.subr.bf16.mxu0 0
    %1540 = vmatpush1.bf16.msra.mxu0 0
    %1541 = vmatprep.subr.bf16.mxu0 0
    %1542 = vmatpush1.bf16.msra.mxu0 0
    %1543 = vmatprep.subr.bf16.mxu0 0
    %1544 = vmatpush1.bf16.msra.mxu0 0
    %1545 = vmatprep.subr.bf16.mxu0 0
    %1546 = vmatpush1.bf16.msra.mxu0 0
    %1547 = vmatprep.subr.bf16.mxu0 0
    %1548 = vmatpush1.bf16.msra.mxu0 0
    %1549 = vmatprep.subr.bf16.mxu0 0
    %1550 = vmatpush1.bf16.msra.mxu0 0
    %1551 = vmatprep.subr.bf16.mxu0 0
    %1552 = vmatpush1.bf16.msra.mxu0 0
    %1553 = vmatprep.subr.bf16.mxu0 0
    %1554 = vmatpush1.bf16.msra.mxu0 0
    %1555 = vmatprep.mubr.bf16.mxu0 0
    %1556 = vmatmul.mubr.bf16.gmra.mrb[0].mxu0 %v1451
    %v1557 = vpop.f32.mrb[0].mxu0
    %v1558 = vadd.f32 %v1473, %v1557
    %v1559 = vpop.f32.mrb[0].mxu0
    %v1560 = vpop.f32.mrb[0].mxu0
    %v1561 = vadd.f32 %v1473, %v1560
    %v1562 = vpop.f32.mrb[0].mxu0
    %1563 = vdwg.mxu0
    %1566 = vrot.lane.b32.xlu0 %v1558, 64
    %v1567 = vpop.permute.xlu0 %1566
    %1568 = vrot.lane.b32.xlu0 %v1561, 64
    %v1569 = vpop.permute.xlu0 %1568
    %v1572 = vmul.f32 %v1356, %v1567
    %v1573 = vmul.f32 %v1360, %v1569
    %1576 = vrot.lane.b32.xlu0 %v1572, 64
    %v1577 = vpop.permute.xlu0 %1576
    %1578 = vrot.lane.b32.xlu0 %v1573, 64
    %v1579 = vpop.permute.xlu0 %1578
    %v1582 = vadd.f32 %v1303, %v1577
    %v1583 = vadd.f32 %v1304, %v1579
    %1584 = vst.msk [vmem:[#allocation6] sm:$0xff] %vm46, %v1582
    %1585 = vst.msk [vmem:[#allocation6 + $0x8] sm:$0xff] %vm46, %v1583
    // Predicated region
    $region46: #{tpu_custom_call.1} parent=1 // pred_check
      _
    $region47: #{tpu_custom_call.1} parent=1 // pred_check_branch
      %1587 = sbr.rel (0) target = $region49
    $region48: #{tpu_custom_call.1} parent=1 // pred_region
      %s1589 = ssub.s32 256, 256
      %1590 = vsyncadd [#allocation7], %s1589
      %s1591 = sshll.u32 [#allocation6], 4
      %s1592 = int_to_ptr.vmem [resolvable:$true] %s1591
      %1597 = dma.vmem_to_hbm [thread:$0]  %s1592, 256, %s11, [#allocation7], 128, 128, 8
    $region49: #{tpu_custom_call.1} parent=1 // pred_fallthru
      _
    // Predicated region
    $region50: #{tpu_custom_call.1} parent=1 // pred_check
      _
    $region51: #{tpu_custom_call.1} parent=1 // pred_check_branch
      %1599 = sbr.rel (0) target = $region53
    $region52: #{tpu_custom_call.1} parent=1 // pred_region
      %1600 = dma.done [#allocation7], 256
    $region53: #{tpu_custom_call.1} parent=1 // pred_fallthru
      _
    %1601 = vsyncpa [#allocation7], 1

</llo_original>
